<compile_context>
chip_gen: v7x
topology: tpu7x:2x2x1
jax: 0.10.0
libtpu: 0.0.40
codegen_flags: <defaults>
</compile_context>

<pallas_src>
import functools

import jax
import jax.numpy as jnp
import numpy as np
from jax.experimental import pallas as pl
from jax.experimental.pallas import tpu as pltpu


# ----------------------------------------------------------------------------
# Pallas kernel: one batch block, full time recurrence inside the kernel.
# ----------------------------------------------------------------------------
def make_generator_kernel(A, E, G, n_steps):
    AE = A + E

    def kernel(img_ref, xpre_ref, gix_ref, h0_ref,
               hw_ref, hb_ref, vw_ref, vb_ref, wihct_ref,
               hseq_ref, alphas_ref, h_sc):
        # Small weights: load once per batch block (index maps are constant,
        # so they are DMA'd only once anyway).
        hw = hw_ref[...]        # (G, A+E+3G)  [W2.T | f_beta_W.T | W_hh.T]
        hb = hb_ref[...]        # (1, A+E+3G)  [0 | f_beta_b | b_hh]  (f32)
        vw = vw_ref[...]        # (1, A)       attention V weight     (f32)
        vb = vb_ref[...]        # (1, 1)       attention V bias       (f32)
        wihct = wihct_ref[...]  # (E, 3G)      context half of W_ih

        # Hidden state scratch, re-initialised unconditionally for this batch
        # block (hoisted init_hidden_state) -> no cross-block leakage possible.
        h_sc[...] = h0_ref[...]

        @pl.loop(0, n_steps)
        def _(t):
            h = h_sc[...]                                        # (Bb, G) f32

            # One fused MXU matmul for all three h-driven projections.
            hy = jnp.dot(h.astype(hw.dtype), hw,
                         preferred_element_type=jnp.float32) + hb
            y = hy[:, :A]           # attention W2(h)        (b2 folded in x_pre)
            f_pre = hy[:, A:AE]     # f_beta pre-activation
            gh = hy[:, AE:]         # GRU hidden-side gates  (b_hh folded in hb)

            # ---- Attention ----  x_pre = img@W1.T + b1 + b2 (precomputed)
            xpre = xpre_ref[...].astype(jnp.float32)             # (Bb, P, A)
            tnh = jnp.tanh(xpre + y[:, None, :])                 # (Bb, P, A)
            # 1-output-column "matmul" as VPU multiply + XLU lane reduce
            # (keeps the MXU slot free for the fused h matmul above).
            e = jnp.sum(tnh * vw, axis=-1) + vb                  # (Bb, P)
            e_max = jnp.max(e, axis=1, keepdims=True)
            e_exp = jnp.exp(e - e_max)
            # exact reciprocal: alphas are a returned output and must sum to 1
            alpha = e_exp / jnp.sum(e_exp, axis=1, keepdims=True)
            img = img_ref[...].astype(jnp.float32)               # (Bb, P, E)
            context = jnp.sum(img * alpha[:, :, None], axis=1)   # (Bb, E)
            context = jax.nn.sigmoid(f_pre) * context            # f_beta gate

            # ---- GRUCell ----  (embedding half of gates + b_ih precomputed,
            # time-major slab; dynamic row read per step)
            gi = gix_ref[t].astype(jnp.float32) + jnp.dot(
                context.astype(wihct.dtype), wihct,
                preferred_element_type=jnp.float32)              # (Bb, 3G)
            i_r, i_z, i_n = gi[:, :G], gi[:, G:2 * G], gi[:, 2 * G:]
            h_r, h_z, h_n = gh[:, :G], gh[:, G:2 * G], gh[:, 2 * G:]
            r = jax.nn.sigmoid(i_r + h_r)
            z = jax.nn.sigmoid(i_z + h_z)
            n = jnp.tanh(i_n + r * h_n)
            h_new = (1.0 - z) * n + z * h

            h_sc[...] = h_new
            hseq_ref[t] = h_new                                  # (Bb, G)
            alphas_ref[t] = alpha                                # (Bb, P)

    return kernel


# ----------------------------------------------------------------------------
# Wrapper: sort, embedding gather, hoisted matmuls, Pallas recurrence,
# batched vocab projection. Fully jax.jit compatible.
# ----------------------------------------------------------------------------
def generator_forward(params, img_feats, caps, cap_lens, *,
                      batch_block=None, compute_dtype=jnp.float32):
    B, P, E = img_feats.shape
    T = caps.shape[1]
    A = params["w1"].shape[0]
    D = params["emb"].shape[1]
    G = params["w_hh"].shape[1]
    n_steps = T - 1                  # static; tail zero-masked like PyTorch

    Bb = B if batch_block is None else batch_block
    assert B % Bb == 0, "batch_block must divide batch size"

    # Sort by caption length (descending), reorder inputs (traceable).
    indices = jnp.argsort(-cap_lens)
    sorted_lens = cap_lens[indices]
    img_s = img_feats[indices]
    caps_s = caps[indices]
    embeddings = params["emb"][caps_s]                            # (B, T, D)
    # NOTE: returned as a JAX array (PyTorch returns a Python list) for jit.
    output_lens = sorted_lens - 1

    # ---- Hoisted, loop-invariant work (full-batch XLA matmuls) ----
    # attention image projection with both attention biases folded in
    x_pre = (jnp.einsum("bpe,ae->bpa", img_s, params["w1"])
             + params["b1"] + params["b2"]).astype(compute_dtype)  # (B, P, A)
    # embedding half of GRU gates (+ b_ih), TIME-MAJOR for dense per-step rows
    w_ih_x = params["w_ih"][:, :D]                                 # (3G, D)
    gi_x_tm = (jnp.einsum("btd,gd->tbg", embeddings[:, :n_steps], w_ih_x)
               + params["b_ih"]).astype(compute_dtype)             # (n_steps,B,3G)
    # init_hidden_state hoisted out of the kernel
    h0 = jnp.maximum(jnp.mean(img_s, axis=1) @ params["init_w"].T
                     + params["init_b"], 0.0).astype(jnp.float32)  # (B, G)
    img_c = img_s.astype(compute_dtype)

    # ---- fused / pre-transposed weights (no .T inside the kernel) ----
    hw_cat = jnp.concatenate(
        [params["w2"].T, params["fb_w"].T, params["w_hh"].T],
        axis=1).astype(compute_dtype)                              # (G, A+E+3G)
    hb_cat = jnp.concatenate(
        [jnp.zeros((A,), jnp.float32), params["fb_b"], params["b_hh"]]
    ).reshape(1, -1).astype(jnp.float32)                           # (1, A+E+3G)
    vw = params["vw"].reshape(1, A).astype(jnp.float32)
    vb = params["vb"].reshape(1, 1).astype(jnp.float32)
    wihct = params["w_ih"][:, D:].T.astype(compute_dtype)          # (E, 3G)

    in_specs = [
        pl.BlockSpec((Bb, P, E), lambda b: (b, 0, 0)),             # img
        pl.BlockSpec((Bb, P, A), lambda b: (b, 0, 0)),             # x_pre
        pl.BlockSpec((n_steps, Bb, 3 * G), lambda b: (0, b, 0)),   # gi_x (t-major)
        pl.BlockSpec((Bb, G), lambda b: (b, 0)),                   # h0
        pl.BlockSpec(hw_cat.shape, lambda b: (0, 0)),              # fused h weights
        pl.BlockSpec(hb_cat.shape, lambda b: (0, 0)),
        pl.BlockSpec(vw.shape, lambda b: (0, 0)),
        pl.BlockSpec(vb.shape, lambda b: (0, 0)),
        pl.BlockSpec(wihct.shape, lambda b: (0, 0)),
    ]
    out_specs = [
        pl.BlockSpec((n_steps, Bb, G), lambda b: (0, b, 0)),       # h_seq (t-major)
        pl.BlockSpec((n_steps, Bb, P), lambda b: (0, b, 0)),       # alphas (t-major)
    ]

    # VMEM budget sized to actual block residency (x2 buffering + headroom),
    # capped at ~85% of the physical per-core VMEM (64 MiB on v7x).
    cbytes = int(np.dtype(compute_dtype).itemsize)
    block_bytes = (
        (Bb * P * E + Bb * P * A + n_steps * Bb * 3 * G) * cbytes
        + Bb * G * 4
        + hw_cat.size * cbytes + wihct.size * cbytes
        + (hb_cat.size + vw.size + vb.size) * 4
        + n_steps * Bb * (G + P) * 4
        + Bb * G * 4)                                              # h scratch
    try:
        vmem_cap = int(pltpu.get_tpu_info().vmem_capacity_bytes)
    except Exception:
        vmem_cap = 64 << 20                                        # v7x worst case
    vmem_limit = int(min(int(0.85 * vmem_cap),
                         max(16 << 20, 2 * block_bytes + (4 << 20))))

    kernel = make_generator_kernel(A, E, G, n_steps)
    h_seq_tm, alphas_tm = pl.pallas_call(
        kernel,
        out_shape=(jax.ShapeDtypeStruct((n_steps, B, G), jnp.float32),
                   jax.ShapeDtypeStruct((n_steps, B, P), jnp.float32)),
        grid=(B // Bb,),
        in_specs=in_specs,
        out_specs=out_specs,
        scratch_shapes=[pltpu.VMEM((Bb, G), jnp.float32)],         # hidden state
        compiler_params=pltpu.CompilerParams(
            dimension_semantics=("parallel",),                     # megacore (v7x)
            vmem_limit_bytes=vmem_limit),
    )(img_c, x_pre, gi_x_tm, h0, hw_cat, hb_cat, vw, vb, wihct)

    # ---- vocab projection batched over ALL timesteps (dropout = identity) ----
    preds = jnp.einsum("tbg,vg->btv", h_seq_tm, params["fc_w"]) + params["fc_b"]
    alphas = jnp.transpose(alphas_tm, (1, 0, 2))                   # (B, n_steps, P)

    # PyTorch fills the WHOLE batch for t < max(output_lens) and leaves zeros
    # beyond; global max-length masking is therefore exact parity.
    t_idx = jnp.arange(n_steps)
    valid = (t_idx < (jnp.max(sorted_lens) - 1))[None, :, None]
    preds = jnp.where(valid, preds, 0.0)
    alphas = jnp.where(valid, alphas, 0.0)

    return preds, caps_s, output_lens, alphas, indices


# ----------------------------------------------------------------------------
# Pure-JAX reference (for correctness check)
# ----------------------------------------------------------------------------
def reference_forward(params, img_feats, caps, cap_lens):
    G = params["w_hh"].shape[1]
    indices = jnp.argsort(-cap_lens)
    img = img_feats[indices]
    caps_s = caps[indices]
    emb = params["emb"][caps_s]
    h = jnp.maximum(jnp.mean(img, 1) @ params["init_w"].T + params["init_b"], 0.0)
    n_steps = int(jnp.max(cap_lens)) - 1
    preds, alphas = [], []
    for t in range(n_steps):
        x = img @ params["w1"].T + params["b1"]
        y = h @ params["w2"].T + params["b2"]
        e = (jnp.tanh(x + y[:, None, :]) @ params["vw"].T)[..., 0] + params["vb"][0]
        alpha = jax.nn.softmax(e, axis=1)
        ctx = jnp.sum(img * alpha[..., None], axis=1)
        gate = jax.nn.sigmoid(h @ params["fb_w"].T + params["fb_b"])
        ctx = gate * ctx
        xin = jnp.concatenate([emb[:, t], ctx], axis=1)
        gi = xin @ params["w_ih"].T + params["b_ih"]
        gh = h @ params["w_hh"].T + params["b_hh"]
        i_r, i_z, i_n = gi[:, :G], gi[:, G:2 * G], gi[:, 2 * G:]
        h_r, h_z, h_n = gh[:, :G], gh[:, G:2 * G], gh[:, 2 * G:]
        r = jax.nn.sigmoid(i_r + h_r)
        z = jax.nn.sigmoid(i_z + h_z)
        n = jnp.tanh(i_n + r * h_n)
        h = (1.0 - z) * n + z * h
        preds.append(h @ params["fc_w"].T + params["fc_b"])
        alphas.append(alpha)
    return jnp.stack(preds, axis=1), jnp.stack(alphas, axis=1)


# ----------------------------------------------------------------------------
# Deterministic parameter init + demo
# ----------------------------------------------------------------------------
def init_params(key, *, attention_dim, embedding_dim, gru_units, vocab_size,
                encoder_dim):
    A, D, G, V, E = attention_dim, embedding_dim, gru_units, vocab_size, encoder_dim
    ks = jax.random.split(key, 16)
    f = lambda k, s: (0.1 * jax.random.normal(k, s)).astype(jnp.float32)
    return {
        "w1": f(ks[0], (A, E)),        "b1": f(ks[1], (A,)),
        "w2": f(ks[2], (A, G)),        "b2": f(ks[3], (A,)),
        "vw": f(ks[4], (1, A)),        "vb": f(ks[5], (1,)),
        "emb": f(ks[6], (V, D)),
        "w_ih": f(ks[7], (3 * G, D + E)), "b_ih": f(ks[8], (3 * G,)),
        "w_hh": f(ks[9], (3 * G, G)),     "b_hh": f(ks[10], (3 * G,)),
        "init_w": f(ks[11], (G, E)),   "init_b": f(ks[12], (G,)),
        "fb_w": f(ks[13], (E, G)),     "fb_b": f(ks[14], (E,)),
        "fc_w": f(ks[15], (V, G)),     "fc_b": jnp.zeros((V,), jnp.float32),
    }


if __name__ == "__main__":
    B, P = 16, 16                # batch, num_pixels
    encoder_dim = 32             # (2048 in the original; small demo dims)
    attention_dim = 32
    embedding_dim = 32
    gru_units = 32
    vocab_size = 64
    T = 8                        # caption length

    key = jax.random.PRNGKey(0)
    kp, ki, kc = jax.random.split(key, 3)

    params = init_params(kp, attention_dim=attention_dim,
                         embedding_dim=embedding_dim, gru_units=gru_units,
                         vocab_size=vocab_size, encoder_dim=encoder_dim)

    img_feats = jax.random.normal(ki, (B, P, encoder_dim), dtype=jnp.float32)
    caps = jax.random.randint(kc, (B, T), 0, vocab_size, dtype=jnp.int32)
    cap_lens = jnp.array([8, 6, 7, 5, 8, 4, 6, 7, 8, 5, 3, 6, 7, 8, 4, 5],
                         dtype=jnp.int32)

    # batch_block=8 exercises the batch-parallel grid axis (2 batch blocks).
    fwd = jax.jit(functools.partial(generator_forward, batch_block=8))
    preds, caps_sorted, output_lens, alphas, indices = fwd(
        params, img_feats, caps, cap_lens)
    jax.block_until_ready((preds, alphas))

    # Correctness vs pure-JAX reference.  Residual tolerance covers XLA's
    # default (bf16-input) f32 matmul precision in the hoisted projections and
    # the reference itself — not any in-kernel approximation (the softmax
    # reciprocal is exact).
    ref_preds, ref_alphas = reference_forward(params, img_feats, caps, cap_lens)
    n_ref = ref_preds.shape[1]
    np.testing.assert_allclose(np.asarray(preds[:, :n_ref]),
                               np.asarray(ref_preds), rtol=5e-3, atol=5e-3)
    np.testing.assert_allclose(np.asarray(alphas[:, :n_ref]),
                               np.asarray(ref_alphas), rtol=5e-3, atol=5e-3)
    # alphas rows inside the decoded region sum to 1 (exact softmax divide)
    np.testing.assert_allclose(np.asarray(alphas[:, :n_ref].sum(-1)), 1.0,
                               rtol=1e-5, atol=1e-5)

    # bf16-storage variant (v6e / v7x path): halves HBM+VMEM traffic, bf16 MXU;
    # element-wise math stays f32 inside the kernel (v5e-safe too).
    fwd_bf16 = jax.jit(functools.partial(generator_forward, batch_block=8,
                                         compute_dtype=jnp.bfloat16))
    preds16, _, _, alphas16, _ = fwd_bf16(params, img_feats, caps, cap_lens)
    jax.block_until_ready((preds16, alphas16))
    np.testing.assert_allclose(np.asarray(preds16[:, :n_ref]),
                               np.asarray(ref_preds), rtol=1e-1, atol=1e-1)

    print("KERNEL_OK")
</pallas_src>

<mosaic_0001>
module attributes {stable_mosaic.version = 11 : i64} {
  func.func @kernel(%arg0: i32, %arg1: memref<8x16x32xf32, #tpu.memory_space<vmem>>, %arg2: memref<8x16x32xf32, #tpu.memory_space<vmem>>, %arg3: memref<7x8x96xf32, #tpu.memory_space<vmem>>, %arg4: memref<8x32xf32, #tpu.memory_space<vmem>>, %arg5: memref<32x160xf32, #tpu.memory_space<vmem>>, %arg6: memref<1x160xf32, #tpu.memory_space<vmem>>, %arg7: memref<1x32xf32, #tpu.memory_space<vmem>>, %arg8: memref<1x1xf32, #tpu.memory_space<vmem>>, %arg9: memref<32x96xf32, #tpu.memory_space<vmem>>, %arg10: memref<7x8x32xf32, #tpu.memory_space<vmem>>, %arg11: memref<7x8x16xf32, #tpu.memory_space<vmem>>, %arg12: memref<8x32xf32, #tpu.memory_space<vmem>>) attributes {dimension_semantics = [#tpu.dimension_semantics<parallel>], iteration_bounds = array<i64: 2>, scalar_prefetch = 0 : i64, scratch_operands = 1 : i64, tpu.core_type = #tpu.core_type<tc>, window_params = [{transform_indices = @transform_0, window_bounds = array<i64: 8, 16, 32>}, {transform_indices = @transform_1, window_bounds = array<i64: 8, 16, 32>}, {transform_indices = @transform_2, window_bounds = array<i64: 7, 8, 96>}, {transform_indices = @transform_3, window_bounds = array<i64: 8, 32>}, {pipeline_mode = #tpu.pipeline_mode<synchronous>, transform_indices = @transform_4, window_bounds = array<i64: 32, 160>}, {pipeline_mode = #tpu.pipeline_mode<synchronous>, transform_indices = @transform_5, window_bounds = array<i64: 1, 160>}, {pipeline_mode = #tpu.pipeline_mode<synchronous>, transform_indices = @transform_6, window_bounds = array<i64: 1, 32>}, {pipeline_mode = #tpu.pipeline_mode<synchronous>, transform_indices = @transform_7, window_bounds = array<i64: 1, 1>}, {pipeline_mode = #tpu.pipeline_mode<synchronous>, transform_indices = @transform_8, window_bounds = array<i64: 32, 96>}, {transform_indices = @transform_9, window_bounds = array<i64: 7, 8, 32>}, {transform_indices = @transform_10, window_bounds = array<i64: 7, 8, 16>}]} {
    %c0 = arith.constant 0 : index
    %c0_0 = arith.constant 0 : index
    %0 = vector.load %arg5[%c0, %c0_0] : memref<32x160xf32, #tpu.memory_space<vmem>>, vector<32x160xf32>
    %c0_1 = arith.constant 0 : index
    %c0_2 = arith.constant 0 : index
    %1 = vector.load %arg6[%c0_1, %c0_2] : memref<1x160xf32, #tpu.memory_space<vmem>>, vector<1x160xf32>
    %c0_3 = arith.constant 0 : index
    %c0_4 = arith.constant 0 : index
    %2 = vector.load %arg7[%c0_3, %c0_4] : memref<1x32xf32, #tpu.memory_space<vmem>>, vector<1x32xf32>
    %c0_5 = arith.constant 0 : index
    %c0_6 = arith.constant 0 : index
    %3 = vector.load %arg8[%c0_5, %c0_6] : memref<1x1xf32, #tpu.memory_space<vmem>>, vector<1x1xf32>
    %c0_7 = arith.constant 0 : index
    %c0_8 = arith.constant 0 : index
    %4 = vector.load %arg9[%c0_7, %c0_8] : memref<32x96xf32, #tpu.memory_space<vmem>>, vector<32x96xf32>
    %c0_9 = arith.constant 0 : index
    %c0_10 = arith.constant 0 : index
    %5 = vector.load %arg4[%c0_9, %c0_10] : memref<8x32xf32, #tpu.memory_space<vmem>>, vector<8x32xf32>
    %c0_11 = arith.constant 0 : index
    %c0_12 = arith.constant 0 : index
    %6 = vector.load %arg12[%c0_11, %c0_12] : memref<8x32xf32, #tpu.memory_space<vmem>>, vector<8x32xf32>
    tpu.vector_store %arg12[%c0_11, %c0_12], %5 {strides = array<i32>} : memref<8x32xf32, #tpu.memory_space<vmem>>, vector<8x32xf32>,
    %c0_i32 = arith.constant 0 : i32
    %c7_i32 = arith.constant 7 : i32
    %7 = arith.addi %c0_i32, %c7_i32 : i32
    %c1_i32 = arith.constant 1 : i32
    scf.for %arg13 = %c0_i32 to %7 step %c1_i32  : i32 {
      %c1_i32_14 = arith.constant 1 : i32
      %8 = arith.muli %arg13, %c1_i32_14 : i32
      %c0_i32_15 = arith.constant 0 : i32
      %9 = arith.addi %c0_i32_15, %8 : i32
      %c0_16 = arith.constant 0 : index
      %c0_17 = arith.constant 0 : index
      %10 = vector.load %arg12[%c0_16, %c0_17] : memref<8x32xf32, #tpu.memory_space<vmem>>, vector<8x32xf32>
      %cst = arith.constant dense<0.000000e+00> : vector<8x160xf32>
      %11 = tpu.matmul %10, %0, %cst {dimension_numbers = #tpu.dot_dimension_numbers<[1], [0], [0], [1], [0, 0, 1, 1], [], []>} : vector<8x32xf32>, vector<32x160xf32>, vector<8x160xf32> -> vector<8x160xf32>
      %12 = vector.broadcast %1 : vector<1x160xf32> to vector<8x160xf32>
      %13 = arith.addf %11, %12 : vector<8x160xf32>
      %14 = vector.extract_strided_slice %13 {offsets = [0, 0], sizes = [8, 32], strides = [1, 1]} : vector<8x160xf32> to vector<8x32xf32>
      %15 = vector.extract_strided_slice %13 {offsets = [0, 32], sizes = [8, 32], strides = [1, 1]} : vector<8x160xf32> to vector<8x32xf32>
      %16 = vector.extract_strided_slice %13 {offsets = [0, 64], sizes = [8, 96], strides = [1, 1]} : vector<8x160xf32> to vector<8x96xf32>
      %c0_18 = arith.constant 0 : index
      %c0_19 = arith.constant 0 : index
      %c0_20 = arith.constant 0 : index
      %17 = vector.load %arg2[%c0_18, %c0_19, %c0_20] : memref<8x16x32xf32, #tpu.memory_space<vmem>>, vector<8x16x32xf32>
      %18 = vector.shape_cast %14 : vector<8x32xf32> to vector<8x1x32xf32>
      %19 = vector.broadcast %18 : vector<8x1x32xf32> to vector<8x16x32xf32>
      %20 = arith.addf %17, %19 : vector<8x16x32xf32>
      %21 = math.tanh %20 : vector<8x16x32xf32>
      %22 = vector.shape_cast %2 : vector<1x32xf32> to vector<1x1x32xf32>
      %23 = vector.broadcast %22 : vector<1x1x32xf32> to vector<8x16x32xf32>
      %24 = arith.mulf %21, %23 : vector<8x16x32xf32>
      %cst_21 = arith.constant dense<0.000000e+00> : vector<8x16xf32>
      %25 = vector.multi_reduction <add>, %24, %cst_21 [2] : vector<8x16x32xf32> to vector<8x16xf32>
      %26 = vector.broadcast %3 : vector<1x1xf32> to vector<8x16xf32>
      %27 = arith.addf %25, %26 : vector<8x16xf32>
      %cst_22 = arith.constant dense<0xFF800000> : vector<8xf32>
      %28 = vector.multi_reduction <maximumf>, %27, %cst_22 [1] : vector<8x16xf32> to vector<8xf32>
      %29 = vector.shape_cast %28 : vector<8xf32> to vector<8x1xf32>
      %30 = vector.broadcast %29 : vector<8x1xf32> to vector<8x16xf32>
      %31 = arith.subf %27, %30 : vector<8x16xf32>
      %32 = math.exp %31 : vector<8x16xf32>
      %cst_23 = arith.constant dense<0.000000e+00> : vector<8xf32>
      %33 = vector.multi_reduction <add>, %32, %cst_23 [1] : vector<8x16xf32> to vector<8xf32>
      %34 = vector.shape_cast %33 : vector<8xf32> to vector<8x1xf32>
      %35 = vector.broadcast %34 : vector<8x1xf32> to vector<8x16xf32>
      %36 = arith.divf %32, %35 : vector<8x16xf32>
      %c0_24 = arith.constant 0 : index
      %c0_25 = arith.constant 0 : index
      %c0_26 = arith.constant 0 : index
      %37 = vector.load %arg1[%c0_24, %c0_25, %c0_26] : memref<8x16x32xf32, #tpu.memory_space<vmem>>, vector<8x16x32xf32>
      %38 = vector.shape_cast %36 : vector<8x16xf32> to vector<8x16x1xf32>
      %39 = vector.broadcast %38 : vector<8x16x1xf32> to vector<8x16x32xf32>
      %40 = arith.mulf %37, %39 : vector<8x16x32xf32>
      %cst_27 = arith.constant dense<0.000000e+00> : vector<8x32xf32>
      %41 = vector.multi_reduction <add>, %40, %cst_27 [1] : vector<8x16x32xf32> to vector<8x32xf32>
      %42 = arith.negf %15 : vector<8x32xf32>
      %43 = math.exp %42 : vector<8x32xf32>
      %cst_28 = arith.constant 1.000000e+00 : f32
      %44 = vector.broadcast %cst_28 : f32 to vector<8x32xf32>
      %45 = arith.addf %44, %43 : vector<8x32xf32>
      %46 = arith.divf %44, %45 : vector<8x32xf32>
      %47 = arith.mulf %46, %41 : vector<8x32xf32>
      %48 = arith.index_cast %9 : i32 to index
      %c0_29 = arith.constant 0 : index
      %c0_30 = arith.constant 0 : index
      %49 = vector.load %arg3[%48, %c0_29, %c0_30] : memref<7x8x96xf32, #tpu.memory_space<vmem>>, vector<1x8x96xf32>
      %50 = vector.shape_cast %49 : vector<1x8x96xf32> to vector<8x96xf32>
      %cst_31 = arith.constant dense<0.000000e+00> : vector<8x96xf32>
      %51 = tpu.matmul %47, %4, %cst_31 {dimension_numbers = #tpu.dot_dimension_numbers<[1], [0], [0], [1], [0, 0, 1, 1], [], []>} : vector<8x32xf32>, vector<32x96xf32>, vector<8x96xf32> -> vector<8x96xf32>
      %52 = arith.addf %50, %51 : vector<8x96xf32>
      %53 = vector.extract_strided_slice %52 {offsets = [0, 0], sizes = [8, 32], strides = [1, 1]} : vector<8x96xf32> to vector<8x32xf32>
      %54 = vector.extract_strided_slice %52 {offsets = [0, 32], sizes = [8, 32], strides = [1, 1]} : vector<8x96xf32> to vector<8x32xf32>
      %55 = vector.extract_strided_slice %52 {offsets = [0, 64], sizes = [8, 32], strides = [1, 1]} : vector<8x96xf32> to vector<8x32xf32>
      %56 = vector.extract_strided_slice %16 {offsets = [0, 0], sizes = [8, 32], strides = [1, 1]} : vector<8x96xf32> to vector<8x32xf32>
      %57 = vector.extract_strided_slice %16 {offsets = [0, 32], sizes = [8, 32], strides = [1, 1]} : vector<8x96xf32> to vector<8x32xf32>
      %58 = vector.extract_strided_slice %16 {offsets = [0, 64], sizes = [8, 32], strides = [1, 1]} : vector<8x96xf32> to vector<8x32xf32>
      %59 = arith.addf %53, %56 : vector<8x32xf32>
      %60 = arith.negf %59 : vector<8x32xf32>
      %61 = math.exp %60 : vector<8x32xf32>
      %cst_32 = arith.constant 1.000000e+00 : f32
      %62 = vector.broadcast %cst_32 : f32 to vector<8x32xf32>
      %63 = arith.addf %62, %61 : vector<8x32xf32>
      %64 = arith.divf %62, %63 : vector<8x32xf32>
      %65 = arith.addf %54, %57 : vector<8x32xf32>
      %66 = arith.negf %65 : vector<8x32xf32>
      %67 = math.exp %66 : vector<8x32xf32>
      %cst_33 = arith.constant 1.000000e+00 : f32
      %68 = vector.broadcast %cst_33 : f32 to vector<8x32xf32>
      %69 = arith.addf %68, %67 : vector<8x32xf32>
      %70 = arith.divf %68, %69 : vector<8x32xf32>
      %71 = arith.mulf %64, %58 : vector<8x32xf32>
      %72 = arith.addf %55, %71 : vector<8x32xf32>
      %73 = math.tanh %72 : vector<8x32xf32>
      %cst_34 = arith.constant 1.000000e+00 : f32
      %74 = vector.broadcast %cst_34 : f32 to vector<8x32xf32>
      %75 = arith.subf %74, %70 : vector<8x32xf32>
      %76 = arith.mulf %75, %73 : vector<8x32xf32>
      %77 = arith.mulf %70, %10 : vector<8x32xf32>
      %78 = arith.addf %76, %77 : vector<8x32xf32>
      %c0_35 = arith.constant 0 : index
      %c0_36 = arith.constant 0 : index
      %79 = vector.load %arg12[%c0_35, %c0_36] : memref<8x32xf32, #tpu.memory_space<vmem>>, vector<8x32xf32>
      tpu.vector_store %arg12[%c0_35, %c0_36], %78 {strides = array<i32>} : memref<8x32xf32, #tpu.memory_space<vmem>>, vector<8x32xf32>,
      %80 = arith.index_cast %9 : i32 to index
      %c0_37 = arith.constant 0 : index
      %c0_38 = arith.constant 0 : index
      %81 = vector.load %arg10[%80, %c0_37, %c0_38] : memref<7x8x32xf32, #tpu.memory_space<vmem>>, vector<1x8x32xf32>
      %82 = vector.shape_cast %81 : vector<1x8x32xf32> to vector<8x32xf32>
      %83 = vector.shape_cast %78 : vector<8x32xf32> to vector<1x8x32xf32>
      tpu.vector_store %arg10[%80, %c0_37, %c0_38], %83 {strides = array<i32>} : memref<7x8x32xf32, #tpu.memory_space<vmem>>, vector<1x8x32xf32>,
      %84 = arith.index_cast %9 : i32 to index
      %c0_39 = arith.constant 0 : index
      %c0_40 = arith.constant 0 : index
      %85 = vector.load %arg11[%84, %c0_39, %c0_40] : memref<7x8x16xf32, #tpu.memory_space<vmem>>, vector<1x8x16xf32>
      %86 = vector.shape_cast %85 : vector<1x8x16xf32> to vector<8x16xf32>
      %87 = vector.shape_cast %36 : vector<8x16xf32> to vector<1x8x16xf32>
      tpu.vector_store %arg11[%84, %c0_39, %c0_40], %87 {strides = array<i32>} : memref<7x8x16xf32, #tpu.memory_space<vmem>>, vector<1x8x16xf32>,
    }
    %c7_i32_13 = arith.constant 7 : i32
    return
  }
  func.func @transform_0(%arg0: i32) -> (i32, i32, i32) {
    %c0_i32 = arith.constant 0 : i32
    %c0_i32_0 = arith.constant 0 : i32
    %c0_i32_1 = arith.constant 0 : i32
    return %arg0, %c0_i32, %c0_i32_0 : i32, i32, i32
  }
  func.func @transform_1(%arg0: i32) -> (i32, i32, i32) {
    %c0_i32 = arith.constant 0 : i32
    %c0_i32_0 = arith.constant 0 : i32
    %c0_i32_1 = arith.constant 0 : i32
    return %arg0, %c0_i32, %c0_i32_0 : i32, i32, i32
  }
  func.func @transform_2(%arg0: i32) -> (i32, i32, i32) {
    %c0_i32 = arith.constant 0 : i32
    %c0_i32_0 = arith.constant 0 : i32
    %c0_i32_1 = arith.constant 0 : i32
    return %c0_i32, %arg0, %c0_i32_0 : i32, i32, i32
  }
  func.func @transform_3(%arg0: i32) -> (i32, i32) {
    %c0_i32 = arith.constant 0 : i32
    %c0_i32_0 = arith.constant 0 : i32
    return %arg0, %c0_i32 : i32, i32
  }
  func.func @transform_4(%arg0: i32) -> (i32, i32) {
    %c0_i32 = arith.constant 0 : i32
    %c0_i32_0 = arith.constant 0 : i32
    %c0_i32_1 = arith.constant 0 : i32
    return %c0_i32, %c0_i32_0 : i32, i32
  }
  func.func @transform_5(%arg0: i32) -> (i32, i32) {
    %c0_i32 = arith.constant 0 : i32
    %c0_i32_0 = arith.constant 0 : i32
    %c0_i32_1 = arith.constant 0 : i32
    return %c0_i32, %c0_i32_0 : i32, i32
  }
  func.func @transform_6(%arg0: i32) -> (i32, i32) {
    %c0_i32 = arith.constant 0 : i32
    %c0_i32_0 = arith.constant 0 : i32
    %c0_i32_1 = arith.constant 0 : i32
    return %c0_i32, %c0_i32_0 : i32, i32
  }
  func.func @transform_7(%arg0: i32) -> (i32, i32) {
    %c0_i32 = arith.constant 0 : i32
    %c0_i32_0 = arith.constant 0 : i32
    %c0_i32_1 = arith.constant 0 : i32
    return %c0_i32, %c0_i32_0 : i32, i32
  }
  func.func @transform_8(%arg0: i32) -> (i32, i32) {
    %c0_i32 = arith.constant 0 : i32
    %c0_i32_0 = arith.constant 0 : i32
    %c0_i32_1 = arith.constant 0 : i32
    return %c0_i32, %c0_i32_0 : i32, i32
  }
  func.func @transform_9(%arg0: i32) -> (i32, i32, i32) {
    %c0_i32 = arith.constant 0 : i32
    %c0_i32_0 = arith.constant 0 : i32
    %c0_i32_1 = arith.constant 0 : i32
    return %c0_i32, %arg0, %c0_i32_0 : i32, i32, i32
  }
  func.func @transform_10(%arg0: i32) -> (i32, i32, i32) {
    %c0_i32 = arith.constant 0 : i32
    %c0_i32_0 = arith.constant 0 : i32
    %c0_i32_1 = arith.constant 0 : i32
    return %c0_i32, %arg0, %c0_i32_0 : i32, i32, i32
  }
}

</mosaic_0001>

<llo_original>
// kernel: neg.1
$region0: #{neg.1}
  #allocation0 [shape = 's32[1]{0}', space=sflag, size = 0x4, scoped, tag = 'scoped memory for neg.1']
  %s0 = inlined_call_operand.vmem [shape: s32[16], index: 0, kind: input, shape index: {}]
  %s1 = inlined_call_operand.vmem [shape: s32[16], index: 1, kind: output, shape index: {}]
  %v2 = vld [vmem:[%s0] sm:$0x1]
  %3 = xla_tuple %v2
  %4 = xla_tuple %3
  %v5 = vsub.s32 0, %v2
  %6 = xla_tuple %v5
  %7 = vst [vmem:[%s1] sm:$0x1] %v5

// kernel: generator_forward.1
$region0: #{generator_forward.1}
  #allocation0 [shape = 'u32[]', space=smem, size = 0x4, offset = 0x4, fixed_abs, tag = 'smem constant byte address 0x4 - core index']
  #allocation1 [shape = 'u32[144,128]{1,0:T(1,128)}', space=vmem, size = 0x12000, scoped, tag = 'internal scratch']
  #allocation2 [shape = 'f32[8,32]{1,0:T(8,128)}', space=vmem, size = 0x1000, scoped, tag = 'scratch operand']
  #allocation3 [shape = 'f32[1,1]{1,0:T(1,128)S(1)}', space=vmem, size = 0x200, scoped, tag = 'scoped memory for generator_forward.1']
  %s0 = inlined_call_operand.vmem [shape: f32[16,16,32], index: 0, kind: input, shape index: {}]
  %s1 = inlined_call_operand.vmem [shape: f32[16,16,32], index: 1, kind: input, shape index: {}]
  %s2 = inlined_call_operand.vmem [shape: f32[7,16,96], index: 2, kind: input, shape index: {}]
  %s3 = inlined_call_operand.vmem [shape: f32[16,32], index: 3, kind: input, shape index: {}]
  %s4 = inlined_call_operand.vmem [shape: f32[32,160], index: 4, kind: input, shape index: {}]
  %s5 = inlined_call_operand.vmem [shape: f32[1,160], index: 5, kind: input, shape index: {}]
  %s6 = inlined_call_operand.vmem [shape: f32[1,32], index: 6, kind: input, shape index: {}]
  %s7 = inlined_call_operand.<no memory space> [shape: f32[1,1], index: 7, kind: input, shape index: {}]
  %s8 = inlined_call_operand.vmem [shape: f32[32,96], index: 8, kind: input, shape index: {}]
  %s9 = inlined_call_operand.vmem [shape: f32[7,16,32], index: 9, kind: output, shape index: {0}]
  %s10 = inlined_call_operand.vmem [shape: f32[7,16,16], index: 10, kind: output, shape index: {1}]
  %11 = xla_tuple %s9, %s10
  %s12 = sld [smem:[#allocation0]]
  $region190: #{generator_forward.1} parent=0
    _
  %s14 = ssub.s32 1, %s12
  %s15 = scalar_select 0, %s14, %s12
  %v16 = vstv %s7
  %17 = vst [vmem:[#allocation3] sm:$0x1] %v16
  $region1: #{generator_forward.1} parent=0
    #allocation4 [shape = 'u8[57344]{0}', space=vmem, size = 0xe000, scoped, tag = 'input window, operand 2']
    #allocation5 [shape = 'u8[57344]{0}', space=vmem, size = 0xe000, scoped, tag = 'output window, operand 0']
    #allocation6 [shape = 'u8[57344]{0}', space=vmem, size = 0xe000, scoped, tag = 'output window, operand 1']
    loop: start=0, step=1, limit=4
    $region2: #{generator_forward.1} parent=1 // loop_pre_header
      _
    $region3: #{generator_forward.1} parent=1 // loop_header
      %s19 = sphi 0, %s23
      %p20 = scmp.ge.s32.totalorder %s19, 4
      %s29 = sphi 0, %s31
      %s32 = sphi 0, %s29
      %s33 = sphi 0, %s32
      %s49 = sphi 0, %s33
      %s55 = sphi 0, %s57
      %s58 = sphi 0, %s55
      %s59 = sphi 0, %s58
      %s75 = sphi 0, %s59
      %s81 = sphi 0, %s83
      %s84 = sphi 0, %s81
      %s85 = sphi 0, %s84
      %s101 = sphi 0, %s85
      %s107 = sphi 0, %s109
      %s110 = sphi 0, %s107
      %s111 = sphi 0, %s110
      %s127 = sphi 0, %s111
      %s131 = sphi 0, %s131
      %s133 = sphi 0, %s131
      %s134 = sphi 0, %s133
      %s148 = sphi 0, %s134
      %s152 = sphi 0, %s152
      %s154 = sphi 0, %s152
      %s155 = sphi 0, %s154
      %s169 = sphi 0, %s155
      %s173 = sphi 0, %s173
      %s175 = sphi 0, %s173
      %s176 = sphi 0, %s175
      %s190 = sphi 0, %s176
      %s194 = sphi 0, %s194
      %s196 = sphi 0, %s194
      %s197 = sphi 0, %s196
      %s211 = sphi 0, %s197
      %s215 = sphi 0, %s215
      %s217 = sphi 0, %s215
      %s218 = sphi 0, %s217
      %s232 = sphi 0, %s218
      %s238 = sphi 0, %s240
      %s241 = sphi 0, %s238
      %s242 = sphi 0, %s241
      %s258 = sphi 0, %s242
      %s264 = sphi 0, %s266
      %s267 = sphi 0, %s264
      %s268 = sphi 0, %s267
      %s284 = sphi 0, %s268
    $region4: #{generator_forward.1} parent=1 // loop_header_branch
      %22 = sbr.rel (%p20) target = $region8
    $region5: #{generator_forward.1} parent=1 // loop_body
      %s24 = ssub.s32 %s19, 1
      %s25 = ssub.s32 %s19, 2
      %s26 = sadd.s32 %s19, 1
      %s27 = ssub.s32 %s19, %s26
      %p28 = scmp.eq.s32.totalorder %s27, 0
      %s30 = sadd.s32 %s29, 1
      %s31 = scalar_select %p28, %s29, %s30
      %p34 = pneg %p28
      %p35 = scmp.eq.s32.totalorder %s19, 1
      %p36 = por %p34, %p35
      %p37 = scmp.ne.s32.totalorder %s29, %s32
      %p38 = scmp.eq.s32.totalorder %s19, 0
      %p39 = por %p37, %p38
      %p40 = scmp.ne.s32.totalorder %s29, %s32
      %p41 = scmp.eq.s32.totalorder %s24, 1
      %p42 = por %p40, %p41
      %p43 = scmp.ne.s32.totalorder %s32, %s33
      %p44 = scmp.eq.s32.totalorder %s24, 0
      %p45 = por %p43, %p44
      %p46 = scmp.ne.s32.totalorder %s32, %s33
      %p47 = scmp.eq.s32.totalorder %s25, 1
      %p48 = por %p46, %p47
      %p50 = scmp.ne.s32.totalorder %s33, %s49
      %p51 = scmp.eq.s32.totalorder %s25, 0
      %p52 = por %p50, %p51
      %s53 = ssub.s32 %s19, %s26
      %p54 = scmp.eq.s32.totalorder %s53, 0
      %s56 = sadd.s32 %s55, 1
      %s57 = scalar_select %p54, %s55, %s56
      %p60 = pneg %p54
      %p61 = scmp.eq.s32.totalorder %s19, 1
      %p62 = por %p60, %p61
      %p63 = scmp.ne.s32.totalorder %s55, %s58
      %p64 = scmp.eq.s32.totalorder %s19, 0
      %p65 = por %p63, %p64
      %p66 = scmp.ne.s32.totalorder %s55, %s58
      %p67 = scmp.eq.s32.totalorder %s24, 1
      %p68 = por %p66, %p67
      %p69 = scmp.ne.s32.totalorder %s58, %s59
      %p70 = scmp.eq.s32.totalorder %s24, 0
      %p71 = por %p69, %p70
      %p72 = scmp.ne.s32.totalorder %s58, %s59
      %p73 = scmp.eq.s32.totalorder %s25, 1
      %p74 = por %p72, %p73
      %p76 = scmp.ne.s32.totalorder %s59, %s75
      %p77 = scmp.eq.s32.totalorder %s25, 0
      %p78 = por %p76, %p77
      %s79 = ssub.s32 %s19, %s26
      %p80 = scmp.eq.s32.totalorder %s79, 0
      %s82 = sadd.s32 %s81, 1
      %s83 = scalar_select %p80, %s81, %s82
      %p86 = pneg %p80
      %p87 = scmp.eq.s32.totalorder %s19, 1
      %p88 = por %p86, %p87
      %p89 = scmp.ne.s32.totalorder %s81, %s84
      %p90 = scmp.eq.s32.totalorder %s19, 0
      %p91 = por %p89, %p90
      %p92 = scmp.ne.s32.totalorder %s81, %s84
      %p93 = scmp.eq.s32.totalorder %s24, 1
      %p94 = por %p92, %p93
      %p95 = scmp.ne.s32.totalorder %s84, %s85
      %p96 = scmp.eq.s32.totalorder %s24, 0
      %p97 = por %p95, %p96
      %p98 = scmp.ne.s32.totalorder %s84, %s85
      %p99 = scmp.eq.s32.totalorder %s25, 1
      %p100 = por %p98, %p99
      %p102 = scmp.ne.s32.totalorder %s85, %s101
      %p103 = scmp.eq.s32.totalorder %s25, 0
      %p104 = por %p102, %p103
      %s105 = ssub.s32 %s19, %s26
      %p106 = scmp.eq.s32.totalorder %s105, 0
      %s108 = sadd.s32 %s107, 1
      %s109 = scalar_select %p106, %s107, %s108
      %p112 = pneg %p106
      %p113 = scmp.eq.s32.totalorder %s19, 1
      %p114 = por %p112, %p113
      %p115 = scmp.ne.s32.totalorder %s107, %s110
      %p116 = scmp.eq.s32.totalorder %s19, 0
      %p117 = por %p115, %p116
      %p118 = scmp.ne.s32.totalorder %s107, %s110
      %p119 = scmp.eq.s32.totalorder %s24, 1
      %p120 = por %p118, %p119
      %p121 = scmp.ne.s32.totalorder %s110, %s111
      %p122 = scmp.eq.s32.totalorder %s24, 0
      %p123 = por %p121, %p122
      %p124 = scmp.ne.s32.totalorder %s110, %s111
      %p125 = scmp.eq.s32.totalorder %s25, 1
      %p126 = por %p124, %p125
      %p128 = scmp.ne.s32.totalorder %s111, %s127
      %p129 = scmp.eq.s32.totalorder %s25, 0
      %p130 = por %p128, %p129
      %s132 = sadd.s32 %s131, 1
      %p135 = scmp.eq.s32.totalorder %s19, 1
      %p136 = scmp.ne.s32.totalorder %s131, %s133
      %p137 = scmp.eq.s32.totalorder %s19, 0
      %p138 = por %p136, %p137
      %p139 = scmp.ne.s32.totalorder %s131, %s133
      %p140 = scmp.eq.s32.totalorder %s24, 1
      %p141 = por %p139, %p140
      %p142 = scmp.ne.s32.totalorder %s133, %s134
      %p143 = scmp.eq.s32.totalorder %s24, 0
      %p144 = por %p142, %p143
      %p145 = scmp.ne.s32.totalorder %s133, %s134
      %p146 = scmp.eq.s32.totalorder %s25, 1
      %p147 = por %p145, %p146
      %p149 = scmp.ne.s32.totalorder %s134, %s148
      %p150 = scmp.eq.s32.totalorder %s25, 0
      %p151 = por %p149, %p150
      %s153 = sadd.s32 %s152, 1
      %p156 = scmp.eq.s32.totalorder %s19, 1
      %p157 = scmp.ne.s32.totalorder %s152, %s154
      %p158 = scmp.eq.s32.totalorder %s19, 0
      %p159 = por %p157, %p158
      %p160 = scmp.ne.s32.totalorder %s152, %s154
      %p161 = scmp.eq.s32.totalorder %s24, 1
      %p162 = por %p160, %p161
      %p163 = scmp.ne.s32.totalorder %s154, %s155
      %p164 = scmp.eq.s32.totalorder %s24, 0
      %p165 = por %p163, %p164
      %p166 = scmp.ne.s32.totalorder %s154, %s155
      %p167 = scmp.eq.s32.totalorder %s25, 1
      %p168 = por %p166, %p167
      %p170 = scmp.ne.s32.totalorder %s155, %s169
      %p171 = scmp.eq.s32.totalorder %s25, 0
      %p172 = por %p170, %p171
      %s174 = sadd.s32 %s173, 1
      %p177 = scmp.eq.s32.totalorder %s19, 1
      %p178 = scmp.ne.s32.totalorder %s173, %s175
      %p179 = scmp.eq.s32.totalorder %s19, 0
      %p180 = por %p178, %p179
      %p181 = scmp.ne.s32.totalorder %s173, %s175
      %p182 = scmp.eq.s32.totalorder %s24, 1
      %p183 = por %p181, %p182
      %p184 = scmp.ne.s32.totalorder %s175, %s176
      %p185 = scmp.eq.s32.totalorder %s24, 0
      %p186 = por %p184, %p185
      %p187 = scmp.ne.s32.totalorder %s175, %s176
      %p188 = scmp.eq.s32.totalorder %s25, 1
      %p189 = por %p187, %p188
      %p191 = scmp.ne.s32.totalorder %s176, %s190
      %p192 = scmp.eq.s32.totalorder %s25, 0
      %p193 = por %p191, %p192
      %s195 = sadd.s32 %s194, 1
      %p198 = scmp.eq.s32.totalorder %s19, 1
      %p199 = scmp.ne.s32.totalorder %s194, %s196
      %p200 = scmp.eq.s32.totalorder %s19, 0
      %p201 = por %p199, %p200
      %p202 = scmp.ne.s32.totalorder %s194, %s196
      %p203 = scmp.eq.s32.totalorder %s24, 1
      %p204 = por %p202, %p203
      %p205 = scmp.ne.s32.totalorder %s196, %s197
      %p206 = scmp.eq.s32.totalorder %s24, 0
      %p207 = por %p205, %p206
      %p208 = scmp.ne.s32.totalorder %s196, %s197
      %p209 = scmp.eq.s32.totalorder %s25, 1
      %p210 = por %p208, %p209
      %p212 = scmp.ne.s32.totalorder %s197, %s211
      %p213 = scmp.eq.s32.totalorder %s25, 0
      %p214 = por %p212, %p213
      %s216 = sadd.s32 %s215, 1
      %p219 = scmp.eq.s32.totalorder %s19, 1
      %p220 = scmp.ne.s32.totalorder %s215, %s217
      %p221 = scmp.eq.s32.totalorder %s19, 0
      %p222 = por %p220, %p221
      %p223 = scmp.ne.s32.totalorder %s215, %s217
      %p224 = scmp.eq.s32.totalorder %s24, 1
      %p225 = por %p223, %p224
      %p226 = scmp.ne.s32.totalorder %s217, %s218
      %p227 = scmp.eq.s32.totalorder %s24, 0
      %p228 = por %p226, %p227
      %p229 = scmp.ne.s32.totalorder %s217, %s218
      %p230 = scmp.eq.s32.totalorder %s25, 1
      %p231 = por %p229, %p230
      %p233 = scmp.ne.s32.totalorder %s218, %s232
      %p234 = scmp.eq.s32.totalorder %s25, 0
      %p235 = por %p233, %p234
      %s236 = ssub.s32 %s19, %s26
      %p237 = scmp.eq.s32.totalorder %s236, 0
      %s239 = sadd.s32 %s238, 1
      %s240 = scalar_select %p237, %s238, %s239
      %p243 = pneg %p237
      %p244 = scmp.eq.s32.totalorder %s19, 1
      %p245 = por %p243, %p244
      %p246 = scmp.ne.s32.totalorder %s238, %s241
      %p247 = scmp.eq.s32.totalorder %s19, 0
      %p248 = por %p246, %p247
      %p249 = scmp.ne.s32.totalorder %s238, %s241
      %p250 = scmp.eq.s32.totalorder %s24, 1
      %p251 = por %p249, %p250
      %p252 = scmp.ne.s32.totalorder %s241, %s242
      %p253 = scmp.eq.s32.totalorder %s24, 0
      %p254 = por %p252, %p253
      %p255 = scmp.ne.s32.totalorder %s241, %s242
      %p256 = scmp.eq.s32.totalorder %s25, 1
      %p257 = por %p255, %p256
      %p259 = scmp.ne.s32.totalorder %s242, %s258
      %p260 = scmp.eq.s32.totalorder %s25, 0
      %p261 = por %p259, %p260
      %s262 = ssub.s32 %s19, %s26
      %p263 = scmp.eq.s32.totalorder %s262, 0
      %s265 = sadd.s32 %s264, 1
      %s266 = scalar_select %p263, %s264, %s265
      %p269 = pneg %p263
      %p270 = scmp.eq.s32.totalorder %s19, 1
      %p271 = por %p269, %p270
      %p272 = scmp.ne.s32.totalorder %s264, %s267
      %p273 = scmp.eq.s32.totalorder %s19, 0
      %p274 = por %p272, %p273
      %p275 = scmp.ne.s32.totalorder %s264, %s267
      %p276 = scmp.eq.s32.totalorder %s24, 1
      %p277 = por %p275, %p276
      %p278 = scmp.ne.s32.totalorder %s267, %s268
      %p279 = scmp.eq.s32.totalorder %s24, 0
      %p280 = por %p278, %p279
      %p281 = scmp.ne.s32.totalorder %s267, %s268
      %p282 = scmp.eq.s32.totalorder %s25, 1
      %p283 = por %p281, %p282
      %p285 = scmp.ne.s32.totalorder %s268, %s284
      %p286 = scmp.eq.s32.totalorder %s25, 0
      %p287 = por %p285, %p286
      %p288 = scmp.le.s32.totalorder 1, %s19
      %p289 = scmp.lt.s32.totalorder %s19, 3
      %p290 = pnand %p288, %p289
      %p291 = pneg %p290
      // Predicated region
      $region9: #{generator_forward.1} parent=5 // pred_check
        _
      $region10: #{generator_forward.1} parent=5 // pred_check_branch
        %293 = sbr.rel (%p290) target = $region12
      $region11: #{generator_forward.1} parent=5 // pred_region
        %s294 = ssub.s32 %s19, 1
        // Predicated region
        $region13: #{generator_forward.1} parent=11 // pred_check
          %p295 = pneg %p144
        $region14: #{generator_forward.1} parent=11 // pred_check_branch
          %297 = sbr.rel (%p295) target = $region16
        $region15: #{generator_forward.1} parent=11 // pred_region
          _
        $region16: #{generator_forward.1} parent=11 // pred_fallthru
          _
        // Predicated region
        $region17: #{generator_forward.1} parent=11 // pred_check
          %p298 = pneg %p165
        $region18: #{generator_forward.1} parent=11 // pred_check_branch
          %300 = sbr.rel (%p298) target = $region20
        $region19: #{generator_forward.1} parent=11 // pred_region
          _
        $region20: #{generator_forward.1} parent=11 // pred_fallthru
          _
        // Predicated region
        $region21: #{generator_forward.1} parent=11 // pred_check
          %p301 = pneg %p186
        $region22: #{generator_forward.1} parent=11 // pred_check_branch
          %303 = sbr.rel (%p301) target = $region24
        $region23: #{generator_forward.1} parent=11 // pred_region
          _
        $region24: #{generator_forward.1} parent=11 // pred_fallthru
          _
        // Predicated region
        $region25: #{generator_forward.1} parent=11 // pred_check
          %p304 = pneg %p207
        $region26: #{generator_forward.1} parent=11 // pred_check_branch
          %306 = sbr.rel (%p304) target = $region28
        $region27: #{generator_forward.1} parent=11 // pred_region
          _
        $region28: #{generator_forward.1} parent=11 // pred_fallthru
          _
        // Predicated region
        $region29: #{generator_forward.1} parent=11 // pred_check
          %p307 = pneg %p228
        $region30: #{generator_forward.1} parent=11 // pred_check_branch
          %309 = sbr.rel (%p307) target = $region32
        $region31: #{generator_forward.1} parent=11 // pred_region
          _
        $region32: #{generator_forward.1} parent=11 // pred_fallthru
          _
      $region12: #{generator_forward.1} parent=5 // pred_fallthru
        _
      %p310 = scmp.lt.s32.totalorder %s19, 2
      // Predicated region
      $region33: #{generator_forward.1} parent=5 // pred_check
        %p311 = pneg %p310
      $region34: #{generator_forward.1} parent=5 // pred_check_branch
        %313 = sbr.rel (%p311) target = $region36
      $region35: #{generator_forward.1} parent=5 // pred_region
        // Predicated region
        $region37: #{generator_forward.1} parent=35 // pred_check
          %p314 = pneg %p39
        $region38: #{generator_forward.1} parent=35 // pred_check_branch
          %316 = sbr.rel (%p314) target = $region40
        $region39: #{generator_forward.1} parent=35 // pred_region
          %s317 = smul.u32 8, %s19
          %p318 = scmp.lt.s32.totalorder %s317, 15
          %s319 = scalar_select %p318, %s317, 15
          %s320 = smul.addr %s319, 2
          %s321 = smul.addr %s320, 8
          %s322 = scalar_lea.vmem %s0, %s321
          %s323 = smul.u32 8, %s19
        $region40: #{generator_forward.1} parent=35 // pred_fallthru
          _
        // Predicated region
        $region41: #{generator_forward.1} parent=35 // pred_check
          %p324 = pneg %p65
        $region42: #{generator_forward.1} parent=35 // pred_check_branch
          %326 = sbr.rel (%p324) target = $region44
        $region43: #{generator_forward.1} parent=35 // pred_region
          %s327 = smul.u32 8, %s19
          %p328 = scmp.lt.s32.totalorder %s327, 15
          %s329 = scalar_select %p328, %s327, 15
          %s330 = smul.addr %s329, 2
          %s331 = smul.addr %s330, 8
          %s332 = scalar_lea.vmem %s1, %s331
          %s333 = smul.u32 8, %s19
        $region44: #{generator_forward.1} parent=35 // pred_fallthru
          _
        // Predicated region
        $region45: #{generator_forward.1} parent=35 // pred_check
          %p334 = pneg %p91
        $region46: #{generator_forward.1} parent=35 // pred_check_branch
          %336 = sbr.rel (%p334) target = $region48
        $region47: #{generator_forward.1} parent=35 // pred_region
          %s337 = sand.u32 %s81, 1
          %s338 = sand.u32 %s81, 1
          %s339 = smul.addr %s338, 56
          %s340 = scalar_lea.vmem [#allocation4], %s339
          %s341 = smul.addr %s19, 8
          %s342 = scalar_lea.vmem %s2, %s341
          // Predicated region
          $region49: #{generator_forward.1} parent=47 // pred_check
            _
          $region50: #{generator_forward.1} parent=47 // pred_check_branch
            %344 = sbr.rel (0) target = $region52
          $region51: #{generator_forward.1} parent=47 // pred_region
            // Predicated region
            $region53: #{generator_forward.1} parent=51 // pred_check
              _
            $region54: #{generator_forward.1} parent=51 // pred_check_branch
              %346 = sbr.rel (0) target = $region56
            $region55: #{generator_forward.1} parent=51 // pred_region
              // Predicated region
              $region68: #{generator_forward.1} parent=55 // pred_check
                _
              $region69: #{generator_forward.1} parent=55 // pred_check_branch
                %373 = sbr.rel (0) target = $region71
              $region70: #{generator_forward.1} parent=55 // pred_region
                loop: start=0, step=1, limit=1
                $region72: #{generator_forward.1} parent=70 // loop_pre_header
                  _
                $region73: #{generator_forward.1} parent=70 // loop_header
                  %s375 = sphi 0, %s379
                  %p376 = scmp.ge.s32.totalorder %s375, 1
                  %s380 = sphi %s342, %s342
                  %s381 = sphi %s340, %s340
                $region74: #{generator_forward.1} parent=70 // loop_header_branch
                  %378 = sbr.rel (%p376) target = $region78
                $region75: #{generator_forward.1} parent=70 // loop_body
                  %v382 = vld [vmem:[%s380] sm:$0xff]
                  %383 = vst [vmem:[%s381] sm:$0xff] %v382
                  %v384 = vld [vmem:[%s380 + $0x10] sm:$0xff]
                  %385 = vst [vmem:[%s381 + $0x8] sm:$0xff] %v384
                  %v386 = vld [vmem:[%s380 + $0x20] sm:$0xff]
                  %387 = vst [vmem:[%s381 + $0x10] sm:$0xff] %v386
                  %v388 = vld [vmem:[%s380 + $0x30] sm:$0xff]
                  %389 = vst [vmem:[%s381 + $0x18] sm:$0xff] %v388
                  %v390 = vld [vmem:[%s380 + $0x40] sm:$0xff]
                  %391 = vst [vmem:[%s381 + $0x20] sm:$0xff] %v390
                  %v392 = vld [vmem:[%s380 + $0x50] sm:$0xff]
                  %393 = vst [vmem:[%s381 + $0x28] sm:$0xff] %v392
                  %v394 = vld [vmem:[%s380 + $0x60] sm:$0xff]
                  %395 = vst [vmem:[%s381 + $0x30] sm:$0xff] %v394
                $region76: #{generator_forward.1} parent=70 // loop_footer
                  %s379 = sadd.s32 1, %s375
                $region77: #{generator_forward.1} parent=70 // loop_footer_branch
                  %374 = sbr.rel target = $region73
                $region78: #{generator_forward.1} parent=70 // loop_exit
                  _
              $region71: #{generator_forward.1} parent=55 // pred_fallthru
                _
              // Predicated region
              $region79: #{generator_forward.1} parent=55 // pred_check
                _
              $region80: #{generator_forward.1} parent=55 // pred_check_branch
                %397 = sbr.rel target = $region82
              $region81: #{generator_forward.1} parent=55 // pred_region
                _
              $region82: #{generator_forward.1} parent=55 // pred_fallthru
                _
            $region56: #{generator_forward.1} parent=51 // pred_fallthru
              _
            // Predicated region
            $region57: #{generator_forward.1} parent=51 // pred_check
              _
            $region58: #{generator_forward.1} parent=51 // pred_check_branch
              %348 = sbr.rel target = $region60
            $region59: #{generator_forward.1} parent=51 // pred_region
              loop: start=0, step=1, limit=1
              $region61: #{generator_forward.1} parent=59 // loop_pre_header
                _
              $region62: #{generator_forward.1} parent=59 // loop_header
                %s351 = sphi 0, %s355
                %p352 = scmp.ge.s32.totalorder %s351, 1
                %s356 = sphi %s342, %s342
                %s357 = sphi %s340, %s340
              $region63: #{generator_forward.1} parent=59 // loop_header_branch
                %354 = sbr.rel (%p352) target = $region67
              $region64: #{generator_forward.1} parent=59 // loop_body
                %v358 = vld [vmem:[%s356] sm:$0xff]
                %359 = vst [vmem:[%s357] sm:$0xff] %v358
                %v360 = vld [vmem:[%s356 + $0x10] sm:$0xff]
                %361 = vst [vmem:[%s357 + $0x8] sm:$0xff] %v360
                %v362 = vld [vmem:[%s356 + $0x20] sm:$0xff]
                %363 = vst [vmem:[%s357 + $0x10] sm:$0xff] %v362
                %v364 = vld [vmem:[%s356 + $0x30] sm:$0xff]
                %365 = vst [vmem:[%s357 + $0x18] sm:$0xff] %v364
                %v366 = vld [vmem:[%s356 + $0x40] sm:$0xff]
                %367 = vst [vmem:[%s357 + $0x20] sm:$0xff] %v366
                %v368 = vld [vmem:[%s356 + $0x50] sm:$0xff]
                %369 = vst [vmem:[%s357 + $0x28] sm:$0xff] %v368
                %v370 = vld [vmem:[%s356 + $0x60] sm:$0xff]
                %371 = vst [vmem:[%s357 + $0x30] sm:$0xff] %v370
              $region65: #{generator_forward.1} parent=59 // loop_footer
                %s355 = sadd.s32 1, %s351
              $region66: #{generator_forward.1} parent=59 // loop_footer_branch
                %350 = sbr.rel target = $region62
              $region67: #{generator_forward.1} parent=59 // loop_exit
                _
            $region60: #{generator_forward.1} parent=51 // pred_fallthru
              _
          $region52: #{generator_forward.1} parent=47 // pred_fallthru
            _
          %398 = vnop
        $region48: #{generator_forward.1} parent=35 // pred_fallthru
          _
        // Predicated region
        $region83: #{generator_forward.1} parent=35 // pred_check
          %p399 = pneg %p117
        $region84: #{generator_forward.1} parent=35 // pred_check_branch
          %401 = sbr.rel (%p399) target = $region86
        $region85: #{generator_forward.1} parent=35 // pred_region
          %p402 = scmp.lt.s32.totalorder %s19, 1
          %s403 = scalar_select %p402, %s19, 1
          %s404 = smul.addr %s403, 8
          %s405 = scalar_lea.vmem %s3, %s404
        $region86: #{generator_forward.1} parent=35 // pred_fallthru
          _
      $region36: #{generator_forward.1} parent=5 // pred_fallthru
        _
      %p406 = scmp.le.s32.totalorder 1, %s19
      %p407 = scmp.lt.s32.totalorder %s19, 3
      %p408 = pnand %p406, %p407
      %p409 = pneg %p408
      // Predicated region
      $region87: #{generator_forward.1} parent=5 // pred_check
        _
      $region88: #{generator_forward.1} parent=5 // pred_check_branch
        %411 = sbr.rel (%p408) target = $region90
      $region89: #{generator_forward.1} parent=5 // pred_region
        %s412 = ssub.s32 %s19, 1
        %s413 = sand.u32 %s84, 1
        %s414 = sand.u32 %s84, 1
        %s415 = smul.addr %s414, 56
        %s416 = scalar_lea.vmem [#allocation4], %s415
        // Predicated region
        $region91: #{generator_forward.1} parent=89 // pred_check
          %p417 = pneg %p97
        $region92: #{generator_forward.1} parent=89 // pred_check_branch
          %419 = sbr.rel (%p417) target = $region94
        $region93: #{generator_forward.1} parent=89 // pred_region
          _
        $region94: #{generator_forward.1} parent=89 // pred_fallthru
          _
        %s420 = smul.u32 8, %s24
        %p421 = scmp.lt.s32.totalorder %s420, 15
        %s422 = scalar_select %p421, %s420, 15
        %s423 = smul.addr %s422, 2
        %s424 = smul.addr %s423, 8
        %s425 = scalar_lea.vmem %s0, %s424
        %p426 = pneg %p45
        %p427 = pneg %p42
        %s428 = smul.u32 8, %s24
        %p429 = scmp.lt.s32.totalorder %s428, 15
        %s430 = scalar_select %p429, %s428, 15
        %s431 = smul.addr %s430, 2
        %s432 = smul.addr %s431, 8
        %s433 = scalar_lea.vmem %s1, %s432
        %p434 = pneg %p71
        %p435 = pneg %p68
        %s436 = sand.u32 %s84, 1
        %s437 = sand.u32 %s84, 1
        %s438 = smul.addr %s437, 56
        %s439 = scalar_lea.vmem [#allocation4], %s438
        %p440 = pneg %p97
        %p441 = pneg %p94
        %p442 = scmp.lt.s32.totalorder %s24, 1
        %s443 = scalar_select %p442, %s24, 1
        %s444 = smul.addr %s443, 8
        %s445 = scalar_lea.vmem %s3, %s444
        %p446 = pneg %p123
        %p447 = pneg %p120
        %p448 = pneg %p144
        %p449 = pneg %p141
        %p450 = pneg %p165
        %p451 = pneg %p162
        %p452 = pneg %p186
        %p453 = pneg %p183
        %p454 = pneg %p207
        %p455 = pneg %p204
        %p456 = pneg %p228
        %p457 = pneg %p225
        %p458 = pneg %p254
        %p459 = pneg %p251
        %s460 = sand.u32 %s241, 1
        %s461 = sand.u32 %s241, 1
        %s462 = smul.addr %s461, 56
        %s463 = scalar_lea.vmem [#allocation5], %s462
        %p464 = pneg %p280
        %p465 = pneg %p277
        %s466 = sand.u32 %s267, 1
        %s467 = sand.u32 %s267, 1
        %s468 = smul.addr %s467, 56
        %s469 = scalar_lea.vmem [#allocation6], %s468
        %s470 = smul.u32 8, %s24
        %p471 = scmp.lt.s32.totalorder %s470, 15
        %s472 = scalar_select %p471, %s470, 15
        %s473 = smul.addr %s472, 2
        %s474 = smul.addr %s473, 8
        %s475 = scalar_lea.vmem %s0, %s474
        %s476 = smul.u32 8, %s24
        %s477 = smul.u32 8, %s24
        %p478 = scmp.lt.s32.totalorder %s477, 15
        %s479 = scalar_select %p478, %s477, 15
        %s480 = smul.addr %s479, 2
        %s481 = smul.addr %s480, 8
        %s482 = scalar_lea.vmem %s1, %s481
        %s483 = smul.u32 8, %s24
        %p484 = scmp.lt.s32.totalorder %s24, 1
        %s485 = scalar_select %p484, %s24, 1
        %s486 = smul.addr %s485, 8
        %s487 = scalar_lea.vmem %s3, %s486
        %v488 = vld [vmem:[%s4] sm:$0xff]
        %v489 = vld [vmem:[%s4 + $0x8] sm:$0xff]
        %v490 = vld [vmem:[%s4 + $0x10] sm:$0xff]
        %v491 = vld [vmem:[%s4 + $0x18] sm:$0xff]
        %v492 = vld [vmem:[%s4 + $0x20] sm:$0xff]
        %v493 = vld [vmem:[%s4 + $0x28] sm:$0xff]
        %v494 = vld [vmem:[%s4 + $0x30] sm:$0xff]
        %v495 = vld [vmem:[%s4 + $0x38] sm:$0xff]
        %v496 = vld [vmem:[%s5] sm:$0x3]
        %v497 = vld [vmem:[%s6] sm:$0x1]
        %v498 = vld [vmem:[#allocation3] sm:$0x1]
        %v499 = vld [vmem:[%s8] sm:$0xff]
        %v500 = vld [vmem:[%s8 + $0x8] sm:$0xff]
        %v501 = vld [vmem:[%s8 + $0x10] sm:$0xff]
        %v502 = vld [vmem:[%s8 + $0x18] sm:$0xff]
        %v503 = vld [vmem:[%s487] sm:$0xff]
        %vm504 = vcmask 261120
        %505 = vst.msk [vmem:[#allocation2] sm:$0xff] %vm504, %v503
        loop: start=0, step=1, limit=7
        $region95: #{generator_forward.1} parent=89 // loop_pre_header
          _
        $region96: #{generator_forward.1} parent=89 // loop_header
          %s507 = sphi 0, %s511
          %p508 = scmp.ge.s32.totalorder %s507, 7
        $region97: #{generator_forward.1} parent=89 // loop_header_branch
          %510 = sbr.rel (%p508) target = $region101
        $region98: #{generator_forward.1} parent=89 // loop_body
          %v512 = vld [vmem:[#allocation2] sm:$0xff]
          %v514 = vlaneseq
          %v515 = vshrl.u32 %v514, 7
          %v516 = vsub.s32 0, %v515
          %v517 = vrot.slane %v496, %v516
          %v518 = vlaneseq
          %v519 = vshrl.u32 %v518, 7
          %v520 = vsub.s32 1, %v519
          %v521 = vrot.slane %v496, %v520
          %v525 = vsel %vm504, %v512, 0
          %527 = vmatprep.subr.mxu0 %v489
          %528 = vmatpush1.msra.mxu0 %v488
          %529 = vmatprep.subr.mxu0 %v491
          %530 = vmatpush1.msra.mxu0 %v490
          %531 = vmatprep.subr.mxu0 %v493
          %532 = vmatpush1.msra.mxu0 %v492
          %533 = vmatprep.subr.mxu0 %v495
          %534 = vmatpush1.msra.mxu0 %v494
          %535 = vmatprep.subr.mxu0 0.0
          %536 = vmatpush1.msra.mxu0 0.0
          %537 = vmatprep.subr.mxu0 0.0
          %538 = vmatpush1.msra.mxu0 0.0
          %539 = vmatprep.subr.mxu0 0.0
          %540 = vmatpush1.msra.mxu0 0.0
          %541 = vmatprep.subr.mxu0 0.0
          %542 = vmatpush1.msra.mxu0 0.0
          %543 = vmatprep.subr.mxu0 0.0
          %544 = vmatpush1.msra.mxu0 0.0
          %545 = vmatprep.subr.mxu0 0.0
          %546 = vmatpush1.msra.mxu0 0.0
          %547 = vmatprep.subr.mxu0 0.0
          %548 = vmatpush1.msra.mxu0 0.0
          %549 = vmatprep.subr.mxu0 0.0
          %550 = vmatpush1.msra.mxu0 0.0
          %551 = vmatprep.subr.mxu0 0.0
          %552 = vmatpush1.msra.mxu0 0.0
          %553 = vmatprep.subr.mxu0 0.0
          %554 = vmatpush1.msra.mxu0 0.0
          %555 = vmatprep.subr.mxu0 0.0
          %556 = vmatpush1.msra.mxu0 0.0
          %557 = vmatprep.subr.mxu0 0.0
          %558 = vmatpush1.msra.mxu0 0.0
          %559 = vmatprep.subr.mxu0 0.0
          %560 = vmatpush1.msra.mxu0 0.0
          %561 = vmatprep.subr.mxu0 0.0
          %562 = vmatpush1.msra.mxu0 0.0
          %563 = vmatprep.subr.mxu0 0.0
          %564 = vmatpush1.msra.mxu0 0.0
          %565 = vmatprep.subr.mxu0 0.0
          %566 = vmatpush1.msra.mxu0 0.0
          %567 = vmatprep.subr.mxu0 0.0
          %568 = vmatpush1.msra.mxu0 0.0
          %569 = vmatprep.subr.mxu0 0.0
          %570 = vmatpush1.msra.mxu0 0.0
          %571 = vmatprep.subr.mxu0 0.0
          %572 = vmatpush1.msra.mxu0 0.0
          %573 = vmatprep.subr.mxu0 0.0
          %574 = vmatpush1.msra.mxu0 0.0
          %575 = vmatprep.subr.mxu0 0.0
          %576 = vmatpush1.msra.mxu0 0.0
          %577 = vmatprep.subr.mxu0 0.0
          %578 = vmatpush1.msra.mxu0 0.0
          %579 = vmatprep.subr.mxu0 0.0
          %580 = vmatpush1.msra.mxu0 0.0
          %581 = vmatprep.subr.mxu0 0.0
          %582 = vmatpush1.msra.mxu0 0.0
          %583 = vmatprep.subr.mxu0 0.0
          %584 = vmatpush1.msra.mxu0 0.0
          %585 = vmatprep.subr.mxu0 0.0
          %586 = vmatpush1.msra.mxu0 0.0
          %587 = vmatprep.subr.mxu0 0.0
          %588 = vmatpush1.msra.mxu0 0.0
          %589 = vmatprep.subr.mxu0 0.0
          %590 = vmatpush1.msra.mxu0 0.0
          %591 = vmatprep.mubr.f32.mxu0 0.0
          %592 = vmatmul.mubr.f32.gmra.mrb[0].mxu0 %v525
          %v593 = vpop.f32.mrb[0].mxu0
          %v594 = vadd.f32 %v517, %v593
          %v595 = vpop.f32.mrb[0].mxu0
          %v596 = vadd.f32 %v521, %v595
          %597 = vdwg.mxu0
          %v598 = vld [vmem:[%s482] sm:$0xff]
          %v599 = vld [vmem:[%s482 + $0x8] sm:$0xff]
          %v600 = vld [vmem:[%s482 + $0x10] sm:$0xff]
          %v601 = vld [vmem:[%s482 + $0x18] sm:$0xff]
          %v602 = vld [vmem:[%s482 + $0x20] sm:$0xff]
          %v603 = vld [vmem:[%s482 + $0x28] sm:$0xff]
          %v604 = vld [vmem:[%s482 + $0x30] sm:$0xff]
          %v605 = vld [vmem:[%s482 + $0x38] sm:$0xff]
          %v606 = vld [vmem:[%s482 + $0x40] sm:$0xff]
          %v607 = vld [vmem:[%s482 + $0x48] sm:$0xff]
          %v608 = vld [vmem:[%s482 + $0x50] sm:$0xff]
          %v609 = vld [vmem:[%s482 + $0x58] sm:$0xff]
          %v610 = vld [vmem:[%s482 + $0x60] sm:$0xff]
          %v611 = vld [vmem:[%s482 + $0x68] sm:$0xff]
          %v612 = vld [vmem:[%s482 + $0x70] sm:$0xff]
          %v613 = vld [vmem:[%s482 + $0x78] sm:$0xff]
          %v615 = vcombine.high %v594, %v594
          %v617 = vunpack.c.l.s4 1966171168
          %v618 = vunpack.c.0.s8 %v617
          %v619 = vlaneseq
          %v620 = vshrl.u32 %v619, 7
          %v621 = vsub.s32 %v618, %v620
          %v622 = vrot.slane %v594, %v621
          %v624 = vunpack.c.l.s4 1966171168
          %v625 = vunpack.c.0.s8 %v624
          %v626 = vlaneseq
          %v627 = vshrl.u32 %v626, 7
          %v628 = vsub.s32 %v625, %v627
          %v629 = vrot.slane %v615, %v628
          %v630 = vcombine.high %v622, %v622
          %v631 = vcombine.high %v629, %v629
          %v633 = vunpack.c.l.s4 1966171168
          %v634 = vunpack.c.0.s8 %v633
          %v635 = vlaneseq
          %v636 = vshrl.u32 %v635, 7
          %v637 = vsub.s32 %v634, %v636
          %v638 = vrot.slane %v622, %v637
          %v640 = vunpack.c.l.s4 1966171168
          %v641 = vunpack.c.0.s8 %v640
          %v642 = vlaneseq
          %v643 = vshrl.u32 %v642, 7
          %v644 = vsub.s32 %v641, %v643
          %v645 = vrot.slane %v629, %v644
          %v647 = vunpack.c.l.s4 1966171168
          %v648 = vunpack.c.0.s8 %v647
          %v649 = vlaneseq
          %v650 = vshrl.u32 %v649, 7
          %v651 = vsub.s32 %v648, %v650
          %v652 = vrot.slane %v630, %v651
          %v654 = vunpack.c.l.s4 1966171168
          %v655 = vunpack.c.0.s8 %v654
          %v656 = vlaneseq
          %v657 = vshrl.u32 %v656, 7
          %v658 = vsub.s32 %v655, %v657
          %v659 = vrot.slane %v631, %v658
          %v660 = vcombine.high %v638, %v638
          %v661 = vcombine.high %v645, %v645
          %v662 = vcombine.high %v652, %v652
          %v663 = vcombine.high %v659, %v659
          %v664 = vlaneseq
          %v665 = vshrl.u32 %v664, 7
          %v666 = vsub.s32 0, %v665
          %v667 = vrot.slane %v638, %v666
          %v668 = vlaneseq
          %v669 = vshrl.u32 %v668, 7
          %v670 = vsub.s32 0, %v669
          %v671 = vrot.slane %v652, %v670
          %v672 = vlaneseq
          %v673 = vshrl.u32 %v672, 7
          %v674 = vsub.s32 0, %v673
          %v675 = vrot.slane %v660, %v674
          %v676 = vlaneseq
          %v677 = vshrl.u32 %v676, 7
          %v678 = vsub.s32 0, %v677
          %v679 = vrot.slane %v662, %v678
          %v680 = vlaneseq
          %v681 = vshrl.u32 %v680, 7
          %v682 = vsub.s32 0, %v681
          %v683 = vrot.slane %v645, %v682
          %v684 = vlaneseq
          %v685 = vshrl.u32 %v684, 7
          %v686 = vsub.s32 0, %v685
          %v687 = vrot.slane %v659, %v686
          %v688 = vlaneseq
          %v689 = vshrl.u32 %v688, 7
          %v690 = vsub.s32 0, %v689
          %v691 = vrot.slane %v661, %v690
          %v692 = vlaneseq
          %v693 = vshrl.u32 %v692, 7
          %v694 = vsub.s32 0, %v693
          %v695 = vrot.slane %v663, %v694
          %v704 = vadd.f32 %v598, %v667
          %v705 = vadd.f32 %v599, %v667
          %v706 = vadd.f32 %v600, %v671
          %v707 = vadd.f32 %v601, %v671
          %v708 = vadd.f32 %v602, %v675
          %v709 = vadd.f32 %v603, %v675
          %v710 = vadd.f32 %v604, %v679
          %v711 = vadd.f32 %v605, %v679
          %v712 = vadd.f32 %v606, %v683
          %v713 = vadd.f32 %v607, %v683
          %v714 = vadd.f32 %v608, %v687
          %v715 = vadd.f32 %v609, %v687
          %v716 = vadd.f32 %v610, %v691
          %v717 = vadd.f32 %v611, %v691
          %v718 = vadd.f32 %v612, %v695
          %v719 = vadd.f32 %v613, %v695
          %v720 = vtanh.pop %v704
          %v721 = vtanh.pop %v705
          %v722 = vtanh.pop %v706
          %v723 = vtanh.pop %v707
          %v724 = vtanh.pop %v708
          %v725 = vtanh.pop %v709
          %v726 = vtanh.pop %v710
          %v727 = vtanh.pop %v711
          %v728 = vtanh.pop %v712
          %v729 = vtanh.pop %v713
          %v730 = vtanh.pop %v714
          %v731 = vtanh.pop %v715
          %v732 = vtanh.pop %v716
          %v733 = vtanh.pop %v717
          %v734 = vtanh.pop %v718
          %v735 = vtanh.pop %v719
          %v737 = vlaneseq
          %v738 = vshrl.u32 %v737, 7
          %v739 = vsub.s32 0, %v738
          %v740 = vrot.slane %v497, %v739
          %v742 = vmul.f32 %v720, %v740
          %v743 = vmul.f32 %v721, %v740
          %v744 = vmul.f32 %v722, %v740
          %v745 = vmul.f32 %v723, %v740
          %v746 = vmul.f32 %v724, %v740
          %v747 = vmul.f32 %v725, %v740
          %v748 = vmul.f32 %v726, %v740
          %v749 = vmul.f32 %v727, %v740
          %v750 = vmul.f32 %v728, %v740
          %v751 = vmul.f32 %v729, %v740
          %v752 = vmul.f32 %v730, %v740
          %v753 = vmul.f32 %v731, %v740
          %v754 = vmul.f32 %v732, %v740
          %v755 = vmul.f32 %v733, %v740
          %v756 = vmul.f32 %v734, %v740
          %v757 = vmul.f32 %v735, %v740
          %v758 = vsel %vm504, %v742, 0.0
          %759 = vadd.xlane.f32.xlu0 %v758
          %v760 = vpop.xlane.xlu0 %759
          %v761 = vsel %vm504, %v743, 0.0
          %762 = vadd.xlane.f32.xlu0 %v761
          %v763 = vpop.xlane.xlu0 %762
          %v764 = vsel %vm504, %v744, 0.0
          %765 = vadd.xlane.f32.xlu0 %v764
          %v766 = vpop.xlane.xlu0 %765
          %v767 = vsel %vm504, %v745, 0.0
          %768 = vadd.xlane.f32.xlu0 %v767
          %v769 = vpop.xlane.xlu0 %768
          %v770 = vsel %vm504, %v746, 0.0
          %771 = vadd.xlane.f32.xlu0 %v770
          %v772 = vpop.xlane.xlu0 %771
          %v773 = vsel %vm504, %v747, 0.0
          %774 = vadd.xlane.f32.xlu0 %v773
          %v775 = vpop.xlane.xlu0 %774
          %v776 = vsel %vm504, %v748, 0.0
          %777 = vadd.xlane.f32.xlu0 %v776
          %v778 = vpop.xlane.xlu0 %777
          %v779 = vsel %vm504, %v749, 0.0
          %780 = vadd.xlane.f32.xlu0 %v779
          %v781 = vpop.xlane.xlu0 %780
          %v782 = vsel %vm504, %v750, 0.0
          %783 = vadd.xlane.f32.xlu0 %v782
          %v784 = vpop.xlane.xlu0 %783
          %v785 = vsel %vm504, %v751, 0.0
          %786 = vadd.xlane.f32.xlu0 %v785
          %v787 = vpop.xlane.xlu0 %786
          %v788 = vsel %vm504, %v752, 0.0
          %789 = vadd.xlane.f32.xlu0 %v788
          %v790 = vpop.xlane.xlu0 %789
          %v791 = vsel %vm504, %v753, 0.0
          %792 = vadd.xlane.f32.xlu0 %v791
          %v793 = vpop.xlane.xlu0 %792
          %v794 = vsel %vm504, %v754, 0.0
          %795 = vadd.xlane.f32.xlu0 %v794
          %v796 = vpop.xlane.xlu0 %795
          %v797 = vsel %vm504, %v755, 0.0
          %798 = vadd.xlane.f32.xlu0 %v797
          %v799 = vpop.xlane.xlu0 %798
          %v800 = vsel %vm504, %v756, 0.0
          %801 = vadd.xlane.f32.xlu0 %v800
          %v802 = vpop.xlane.xlu0 %801
          %v803 = vsel %vm504, %v757, 0.0
          %804 = vadd.xlane.f32.xlu0 %v803
          %v805 = vpop.xlane.xlu0 %804
          %v807 = vlaneseq
          %v808 = vshrl.u32 %v807, 7
          %v809 = vsub.s32 0, %v808
          %v810 = vrot.slane %v498, %v809
          %811 = vset.pattern.permute.xlu0 0
          %812 = vperm.xlu0 %811, %v810
          %v813 = vpop.permute.xlu0 %812
          %v815 = vadd.f32 %v760, %v813
          %v816 = vadd.f32 %v763, %v813
          %v817 = vadd.f32 %v766, %v813
          %v818 = vadd.f32 %v769, %v813
          %v819 = vadd.f32 %v772, %v813
          %v820 = vadd.f32 %v775, %v813
          %v821 = vadd.f32 %v778, %v813
          %v822 = vadd.f32 %v781, %v813
          %v823 = vadd.f32 %v784, %v813
          %v824 = vadd.f32 %v787, %v813
          %v825 = vadd.f32 %v790, %v813
          %v826 = vadd.f32 %v793, %v813
          %v827 = vadd.f32 %v796, %v813
          %v828 = vadd.f32 %v799, %v813
          %v829 = vadd.f32 %v802, %v813
          %v830 = vadd.f32 %v805, %v813
          %v847 = vlaneseq
          %v848 = vand.u32 %v847, 127
          %v849 = vlaneseq
          %v850 = vshrl.u32 %v849, 7
          %v851 = vsub.s32 %v848, %v850
          %v852 = vrot.slane %v815, %v851
          %v853 = vadd.s32 %v848, 4294967288
          %v854 = vlaneseq
          %v855 = vshrl.u32 %v854, 7
          %v856 = vsub.s32 %v853, %v855
          %v857 = vrot.slane %v816, %v856
          %vm858 = vcmask 130112
          %v859 = vsel %vm858, %v857, %v852
          %v860 = vlaneseq
          %v861 = vshrl.u32 %v860, 7
          %v862 = vsub.s32 %v848, %v861
          %v863 = vrot.slane %v817, %v862
          %v864 = vlaneseq
          %v865 = vshrl.u32 %v864, 7
          %v866 = vsub.s32 %v853, %v865
          %v867 = vrot.slane %v818, %v866
          %v868 = vsel %vm858, %v867, %v863
          %v869 = vlaneseq
          %v870 = vshrl.u32 %v869, 7
          %v871 = vsub.s32 %v848, %v870
          %v872 = vrot.slane %v819, %v871
          %v873 = vlaneseq
          %v874 = vshrl.u32 %v873, 7
          %v875 = vsub.s32 %v853, %v874
          %v876 = vrot.slane %v820, %v875
          %v877 = vsel %vm858, %v876, %v872
          %v878 = vlaneseq
          %v879 = vshrl.u32 %v878, 7
          %v880 = vsub.s32 %v848, %v879
          %v881 = vrot.slane %v821, %v880
          %v882 = vlaneseq
          %v883 = vshrl.u32 %v882, 7
          %v884 = vsub.s32 %v853, %v883
          %v885 = vrot.slane %v822, %v884
          %v886 = vsel %vm858, %v885, %v881
          %v887 = vlaneseq
          %v888 = vshrl.u32 %v887, 7
          %v889 = vsub.s32 %v848, %v888
          %v890 = vrot.slane %v823, %v889
          %v891 = vlaneseq
          %v892 = vshrl.u32 %v891, 7
          %v893 = vsub.s32 %v853, %v892
          %v894 = vrot.slane %v824, %v893
          %v895 = vsel %vm858, %v894, %v890
          %v896 = vlaneseq
          %v897 = vshrl.u32 %v896, 7
          %v898 = vsub.s32 %v848, %v897
          %v899 = vrot.slane %v825, %v898
          %v900 = vlaneseq
          %v901 = vshrl.u32 %v900, 7
          %v902 = vsub.s32 %v853, %v901
          %v903 = vrot.slane %v826, %v902
          %v904 = vsel %vm858, %v903, %v899
          %v905 = vlaneseq
          %v906 = vshrl.u32 %v905, 7
          %v907 = vsub.s32 %v848, %v906
          %v908 = vrot.slane %v827, %v907
          %v909 = vlaneseq
          %v910 = vshrl.u32 %v909, 7
          %v911 = vsub.s32 %v853, %v910
          %v912 = vrot.slane %v828, %v911
          %v913 = vsel %vm858, %v912, %v908
          %v914 = vlaneseq
          %v915 = vshrl.u32 %v914, 7
          %v916 = vsub.s32 %v848, %v915
          %v917 = vrot.slane %v829, %v916
          %v918 = vlaneseq
          %v919 = vshrl.u32 %v918, 7
          %v920 = vsub.s32 %v853, %v919
          %v921 = vrot.slane %v830, %v920
          %v922 = vsel %vm858, %v921, %v917
          %vm923 = vcmask 1041409
          %v924 = vsel %vm923, %v868, %v859
          %vm925 = vcmask 1042434
          %v926 = vsel %vm925, %v877, %v924
          %vm927 = vcmask 1043459
          %v928 = vsel %vm927, %v886, %v926
          %vm929 = vcmask 1044484
          %v930 = vsel %vm929, %v895, %v928
          %vm931 = vcmask 1045509
          %v932 = vsel %vm931, %v904, %v930
          %vm933 = vcmask 1046534
          %v934 = vsel %vm933, %v913, %v932
          %vm935 = vcmask 1047559
          %v936 = vsel %vm935, %v922, %v934
          %vm938 = vcmask 130048
          %v939 = vsel %vm938, %v936, -inf
          %940 = vmax.xlane.f32.xlu0 %v939
          %v941 = vpop.xlane.xlu0 %940
          %v943 = vlaneseq
          %v944 = vshrl.u32 %v943, 7
          %v945 = vsub.s32 0, %v944
          %v946 = vrot.slane %v941, %v945
          %v947 = vlaneseq
          %v948 = vshrl.u32 %v947, 7
          %v949 = vsub.s32 1, %v948
          %v950 = vrot.slane %v941, %v949
          %v951 = vlaneseq
          %v952 = vshrl.u32 %v951, 7
          %v953 = vsub.s32 2, %v952
          %v954 = vrot.slane %v941, %v953
          %v955 = vlaneseq
          %v956 = vshrl.u32 %v955, 7
          %v957 = vsub.s32 3, %v956
          %v958 = vrot.slane %v941, %v957
          %v959 = vlaneseq
          %v960 = vshrl.u32 %v959, 7
          %v961 = vsub.s32 4, %v960
          %v962 = vrot.slane %v941, %v961
          %v963 = vlaneseq
          %v964 = vshrl.u32 %v963, 7
          %v965 = vsub.s32 5, %v964
          %v966 = vrot.slane %v941, %v965
          %v967 = vlaneseq
          %v968 = vshrl.u32 %v967, 7
          %v969 = vsub.s32 6, %v968
          %v970 = vrot.slane %v941, %v969
          %v971 = vlaneseq
          %v972 = vshrl.u32 %v971, 7
          %v973 = vsub.s32 7, %v972
          %v974 = vrot.slane %v941, %v973
          %v983 = vsub.f32 %v815, %v946
          %v984 = vsub.f32 %v816, %v946
          %v985 = vsub.f32 %v817, %v950
          %v986 = vsub.f32 %v818, %v950
          %v987 = vsub.f32 %v819, %v954
          %v988 = vsub.f32 %v820, %v954
          %v989 = vsub.f32 %v821, %v958
          %v990 = vsub.f32 %v822, %v958
          %v991 = vsub.f32 %v823, %v962
          %v992 = vsub.f32 %v824, %v962
          %v993 = vsub.f32 %v825, %v966
          %v994 = vsub.f32 %v826, %v966
          %v995 = vsub.f32 %v827, %v970
          %v996 = vsub.f32 %v828, %v970
          %v997 = vsub.f32 %v829, %v974
          %v998 = vsub.f32 %v830, %v974
          %v999 = vmul.f32 %v983, 1.442695
          %v1000 = vpow.pop %v999
          %v1001 = vmul.f32 %v984, 1.442695
          %v1002 = vpow.pop %v1001
          %v1003 = vmul.f32 %v985, 1.442695
          %v1004 = vpow.pop %v1003
          %v1005 = vmul.f32 %v986, 1.442695
          %v1006 = vpow.pop %v1005
          %v1007 = vmul.f32 %v987, 1.442695
          %v1008 = vpow.pop %v1007
          %v1009 = vmul.f32 %v988, 1.442695
          %v1010 = vpow.pop %v1009
          %v1011 = vmul.f32 %v989, 1.442695
          %v1012 = vpow.pop %v1011
          %v1013 = vmul.f32 %v990, 1.442695
          %v1014 = vpow.pop %v1013
          %v1015 = vmul.f32 %v991, 1.442695
          %v1016 = vpow.pop %v1015
          %v1017 = vmul.f32 %v992, 1.442695
          %v1018 = vpow.pop %v1017
          %v1019 = vmul.f32 %v993, 1.442695
          %v1020 = vpow.pop %v1019
          %v1021 = vmul.f32 %v994, 1.442695
          %v1022 = vpow.pop %v1021
          %v1023 = vmul.f32 %v995, 1.442695
          %v1024 = vpow.pop %v1023
          %v1025 = vmul.f32 %v996, 1.442695
          %v1026 = vpow.pop %v1025
          %v1027 = vmul.f32 %v997, 1.442695
          %v1028 = vpow.pop %v1027
          %v1029 = vmul.f32 %v998, 1.442695
          %v1030 = vpow.pop %v1029
          %1047 = vset.pattern.permute.xlu0 0
          %1048 = vperm.xlu0 %1047, %v1000
          %v1049 = vpop.permute.xlu0 %1048
          %1050 = vset.pattern.permute.xlu0 0
          %1051 = vperm.xlu0 %1050, %v1002
          %v1052 = vpop.permute.xlu0 %1051
          %1053 = vset.pattern.permute.xlu0 0
          %1054 = vperm.xlu0 %1053, %v1004
          %v1055 = vpop.permute.xlu0 %1054
          %1056 = vset.pattern.permute.xlu0 0
          %1057 = vperm.xlu0 %1056, %v1006
          %v1058 = vpop.permute.xlu0 %1057
          %1059 = vset.pattern.permute.xlu0 0
          %1060 = vperm.xlu0 %1059, %v1008
          %v1061 = vpop.permute.xlu0 %1060
          %1062 = vset.pattern.permute.xlu0 0
          %1063 = vperm.xlu0 %1062, %v1010
          %v1064 = vpop.permute.xlu0 %1063
          %1065 = vset.pattern.permute.xlu0 0
          %1066 = vperm.xlu0 %1065, %v1012
          %v1067 = vpop.permute.xlu0 %1066
          %1068 = vset.pattern.permute.xlu0 0
          %1069 = vperm.xlu0 %1068, %v1014
          %v1070 = vpop.permute.xlu0 %1069
          %1071 = vset.pattern.permute.xlu0 0
          %1072 = vperm.xlu0 %1071, %v1016
          %v1073 = vpop.permute.xlu0 %1072
          %1074 = vset.pattern.permute.xlu0 0
          %1075 = vperm.xlu0 %1074, %v1018
          %v1076 = vpop.permute.xlu0 %1075
          %1077 = vset.pattern.permute.xlu0 0
          %1078 = vperm.xlu0 %1077, %v1020
          %v1079 = vpop.permute.xlu0 %1078
          %1080 = vset.pattern.permute.xlu0 0
          %1081 = vperm.xlu0 %1080, %v1022
          %v1082 = vpop.permute.xlu0 %1081
          %1083 = vset.pattern.permute.xlu0 0
          %1084 = vperm.xlu0 %1083, %v1024
          %v1085 = vpop.permute.xlu0 %1084
          %1086 = vset.pattern.permute.xlu0 0
          %1087 = vperm.xlu0 %1086, %v1026
          %v1088 = vpop.permute.xlu0 %1087
          %1089 = vset.pattern.permute.xlu0 0
          %1090 = vperm.xlu0 %1089, %v1028
          %v1091 = vpop.permute.xlu0 %1090
          %1092 = vset.pattern.permute.xlu0 0
          %1093 = vperm.xlu0 %1092, %v1030
          %v1094 = vpop.permute.xlu0 %1093
          %v1095 = vlaneseq
          %v1096 = vshrl.u32 %v1095, 7
          %v1097 = vsub.s32 %v848, %v1096
          %v1098 = vrot.slane %v1049, %v1097
          %v1099 = vlaneseq
          %v1100 = vshrl.u32 %v1099, 7
          %v1101 = vsub.s32 %v853, %v1100
          %v1102 = vrot.slane %v1052, %v1101
          %v1103 = vsel %vm858, %v1102, %v1098
          %v1104 = vlaneseq
          %v1105 = vshrl.u32 %v1104, 7
          %v1106 = vsub.s32 %v848, %v1105
          %v1107 = vrot.slane %v1055, %v1106
          %v1108 = vlaneseq
          %v1109 = vshrl.u32 %v1108, 7
          %v1110 = vsub.s32 %v853, %v1109
          %v1111 = vrot.slane %v1058, %v1110
          %v1112 = vsel %vm858, %v1111, %v1107
          %v1113 = vlaneseq
          %v1114 = vshrl.u32 %v1113, 7
          %v1115 = vsub.s32 %v848, %v1114
          %v1116 = vrot.slane %v1061, %v1115
          %v1117 = vlaneseq
          %v1118 = vshrl.u32 %v1117, 7
          %v1119 = vsub.s32 %v853, %v1118
          %v1120 = vrot.slane %v1064, %v1119
          %v1121 = vsel %vm858, %v1120, %v1116
          %v1122 = vlaneseq
          %v1123 = vshrl.u32 %v1122, 7
          %v1124 = vsub.s32 %v848, %v1123
          %v1125 = vrot.slane %v1067, %v1124
          %v1126 = vlaneseq
          %v1127 = vshrl.u32 %v1126, 7
          %v1128 = vsub.s32 %v853, %v1127
          %v1129 = vrot.slane %v1070, %v1128
          %v1130 = vsel %vm858, %v1129, %v1125
          %v1131 = vlaneseq
          %v1132 = vshrl.u32 %v1131, 7
          %v1133 = vsub.s32 %v848, %v1132
          %v1134 = vrot.slane %v1073, %v1133
          %v1135 = vlaneseq
          %v1136 = vshrl.u32 %v1135, 7
          %v1137 = vsub.s32 %v853, %v1136
          %v1138 = vrot.slane %v1076, %v1137
          %v1139 = vsel %vm858, %v1138, %v1134
          %v1140 = vlaneseq
          %v1141 = vshrl.u32 %v1140, 7
          %v1142 = vsub.s32 %v848, %v1141
          %v1143 = vrot.slane %v1079, %v1142
          %v1144 = vlaneseq
          %v1145 = vshrl.u32 %v1144, 7
          %v1146 = vsub.s32 %v853, %v1145
          %v1147 = vrot.slane %v1082, %v1146
          %v1148 = vsel %vm858, %v1147, %v1143
          %v1149 = vlaneseq
          %v1150 = vshrl.u32 %v1149, 7
          %v1151 = vsub.s32 %v848, %v1150
          %v1152 = vrot.slane %v1085, %v1151
          %v1153 = vlaneseq
          %v1154 = vshrl.u32 %v1153, 7
          %v1155 = vsub.s32 %v853, %v1154
          %v1156 = vrot.slane %v1088, %v1155
          %v1157 = vsel %vm858, %v1156, %v1152
          %v1158 = vlaneseq
          %v1159 = vshrl.u32 %v1158, 7
          %v1160 = vsub.s32 %v848, %v1159
          %v1161 = vrot.slane %v1091, %v1160
          %v1162 = vlaneseq
          %v1163 = vshrl.u32 %v1162, 7
          %v1164 = vsub.s32 %v853, %v1163
          %v1165 = vrot.slane %v1094, %v1164
          %v1166 = vsel %vm858, %v1165, %v1161
          %v1167 = vsel %vm923, %v1112, %v1103
          %v1168 = vsel %vm925, %v1121, %v1167
          %v1169 = vsel %vm927, %v1130, %v1168
          %v1170 = vsel %vm929, %v1139, %v1169
          %v1171 = vsel %vm931, %v1148, %v1170
          %v1172 = vsel %vm933, %v1157, %v1171
          %v1173 = vsel %vm935, %v1166, %v1172
          %v1175 = vsel %vm938, %v1173, 0.0
          %1176 = vadd.xlane.f32.xlu0 %v1175
          %v1177 = vpop.xlane.xlu0 %1176
          %v1179 = vlaneseq
          %v1180 = vshrl.u32 %v1179, 7
          %v1181 = vsub.s32 0, %v1180
          %v1182 = vrot.slane %v1177, %v1181
          %v1183 = vlaneseq
          %v1184 = vshrl.u32 %v1183, 7
          %v1185 = vsub.s32 1, %v1184
          %v1186 = vrot.slane %v1177, %v1185
          %v1187 = vlaneseq
          %v1188 = vshrl.u32 %v1187, 7
          %v1189 = vsub.s32 2, %v1188
          %v1190 = vrot.slane %v1177, %v1189
          %v1191 = vlaneseq
          %v1192 = vshrl.u32 %v1191, 7
          %v1193 = vsub.s32 3, %v1192
          %v1194 = vrot.slane %v1177, %v1193
          %v1195 = vlaneseq
          %v1196 = vshrl.u32 %v1195, 7
          %v1197 = vsub.s32 4, %v1196
          %v1198 = vrot.slane %v1177, %v1197
          %v1199 = vlaneseq
          %v1200 = vshrl.u32 %v1199, 7
          %v1201 = vsub.s32 5, %v1200
          %v1202 = vrot.slane %v1177, %v1201
          %v1203 = vlaneseq
          %v1204 = vshrl.u32 %v1203, 7
          %v1205 = vsub.s32 6, %v1204
          %v1206 = vrot.slane %v1177, %v1205
          %v1207 = vlaneseq
          %v1208 = vshrl.u32 %v1207, 7
          %v1209 = vsub.s32 7, %v1208
          %v1210 = vrot.slane %v1177, %v1209
          %v1219 = vrcp.pop %v1182
          %v1220 = vmul.f32 %v1000, %v1219
          %v1221 = vmul.f32 %v1002, %v1219
          %v1222 = vrcp.pop %v1186
          %v1223 = vmul.f32 %v1004, %v1222
          %v1224 = vmul.f32 %v1006, %v1222
          %v1225 = vrcp.pop %v1190
          %v1226 = vmul.f32 %v1008, %v1225
          %v1227 = vmul.f32 %v1010, %v1225
          %v1228 = vrcp.pop %v1194
          %v1229 = vmul.f32 %v1012, %v1228
          %v1230 = vmul.f32 %v1014, %v1228
          %v1231 = vrcp.pop %v1198
          %v1232 = vmul.f32 %v1016, %v1231
          %v1233 = vmul.f32 %v1018, %v1231
          %v1234 = vrcp.pop %v1202
          %v1235 = vmul.f32 %v1020, %v1234
          %v1236 = vmul.f32 %v1022, %v1234
          %v1237 = vrcp.pop %v1206
          %v1238 = vmul.f32 %v1024, %v1237
          %v1239 = vmul.f32 %v1026, %v1237
          %v1240 = vrcp.pop %v1210
          %v1241 = vmul.f32 %v1028, %v1240
          %v1242 = vmul.f32 %v1030, %v1240
          %v1243 = vld [vmem:[%s475] sm:$0xff]
          %v1244 = vld [vmem:[%s475 + $0x8] sm:$0xff]
          %v1245 = vld [vmem:[%s475 + $0x10] sm:$0xff]
          %v1246 = vld [vmem:[%s475 + $0x18] sm:$0xff]
          %v1247 = vld [vmem:[%s475 + $0x20] sm:$0xff]
          %v1248 = vld [vmem:[%s475 + $0x28] sm:$0xff]
          %v1249 = vld [vmem:[%s475 + $0x30] sm:$0xff]
          %v1250 = vld [vmem:[%s475 + $0x38] sm:$0xff]
          %v1251 = vld [vmem:[%s475 + $0x40] sm:$0xff]
          %v1252 = vld [vmem:[%s475 + $0x48] sm:$0xff]
          %v1253 = vld [vmem:[%s475 + $0x50] sm:$0xff]
          %v1254 = vld [vmem:[%s475 + $0x58] sm:$0xff]
          %v1255 = vld [vmem:[%s475 + $0x60] sm:$0xff]
          %v1256 = vld [vmem:[%s475 + $0x68] sm:$0xff]
          %v1257 = vld [vmem:[%s475 + $0x70] sm:$0xff]
          %v1258 = vld [vmem:[%s475 + $0x78] sm:$0xff]
          %1260 = vset.pattern.permute.xlu0 0
          %1261 = vperm.xlu0 %1260, %v1220
          %v1262 = vpop.permute.xlu0 %1261
          %1265 = vset.pattern.permute.xlu0 0
          %1266 = vperm.xlu0 %1265, %v1221
          %v1267 = vpop.permute.xlu0 %1266
          %1270 = vset.pattern.permute.xlu0 0
          %1271 = vperm.xlu0 %1270, %v1223
          %v1272 = vpop.permute.xlu0 %1271
          %1275 = vset.pattern.permute.xlu0 0
          %1276 = vperm.xlu0 %1275, %v1224
          %v1277 = vpop.permute.xlu0 %1276
          %1280 = vset.pattern.permute.xlu0 0
          %1281 = vperm.xlu0 %1280, %v1226
          %v1282 = vpop.permute.xlu0 %1281
          %1285 = vset.pattern.permute.xlu0 0
          %1286 = vperm.xlu0 %1285, %v1227
          %v1287 = vpop.permute.xlu0 %1286
          %1290 = vset.pattern.permute.xlu0 0
          %1291 = vperm.xlu0 %1290, %v1229
          %v1292 = vpop.permute.xlu0 %1291
          %1295 = vset.pattern.permute.xlu0 0
          %1296 = vperm.xlu0 %1295, %v1230
          %v1297 = vpop.permute.xlu0 %1296
          %1300 = vset.pattern.permute.xlu0 0
          %1301 = vperm.xlu0 %1300, %v1232
          %v1302 = vpop.permute.xlu0 %1301
          %1305 = vset.pattern.permute.xlu0 0
          %1306 = vperm.xlu0 %1305, %v1233
          %v1307 = vpop.permute.xlu0 %1306
          %1310 = vset.pattern.permute.xlu0 0
          %1311 = vperm.xlu0 %1310, %v1235
          %v1312 = vpop.permute.xlu0 %1311
          %1315 = vset.pattern.permute.xlu0 0
          %1316 = vperm.xlu0 %1315, %v1236
          %v1317 = vpop.permute.xlu0 %1316
          %1320 = vset.pattern.permute.xlu0 0
          %1321 = vperm.xlu0 %1320, %v1238
          %v1322 = vpop.permute.xlu0 %1321
          %1325 = vset.pattern.permute.xlu0 0
          %1326 = vperm.xlu0 %1325, %v1239
          %v1327 = vpop.permute.xlu0 %1326
          %1330 = vset.pattern.permute.xlu0 0
          %1331 = vperm.xlu0 %1330, %v1241
          %v1332 = vpop.permute.xlu0 %1331
          %1335 = vset.pattern.permute.xlu0 0
          %1336 = vperm.xlu0 %1335, %v1242
          %v1337 = vpop.permute.xlu0 %1336
          %v1339 = vmul.f32 %v1243, %v1262
          %v1340 = vmul.f32 %v1244, %v1267
          %v1341 = vmul.f32 %v1245, %v1272
          %v1342 = vmul.f32 %v1246, %v1277
          %v1343 = vmul.f32 %v1247, %v1282
          %v1344 = vmul.f32 %v1248, %v1287
          %v1345 = vmul.f32 %v1249, %v1292
          %v1346 = vmul.f32 %v1250, %v1297
          %v1347 = vmul.f32 %v1251, %v1302
          %v1348 = vmul.f32 %v1252, %v1307
          %v1349 = vmul.f32 %v1253, %v1312
          %v1350 = vmul.f32 %v1254, %v1317
          %v1351 = vmul.f32 %v1255, %v1322
          %v1352 = vmul.f32 %v1256, %v1327
          %v1353 = vmul.f32 %v1257, %v1332
          %v1354 = vmul.f32 %v1258, %v1337
          %v1355 = vsel %vm504, %v1339, 0.0
          %v1356 = vsel %vm504, %v1340, 0.0
          %v1357 = vadd.f32 %v1355, %v1356
          %v1358 = vrot.slane %v1357, 4
          %v1359 = vadd.f32 %v1357, %v1358
          %v1360 = vrot.slane %v1359, 2
          %v1361 = vadd.f32 %v1359, %v1360
          %v1362 = vrot.slane %v1361, 1
          %v1363 = vadd.f32 %v1361, %v1362
          %v1364 = vsel %vm504, %v1341, 0.0
          %v1365 = vsel %vm504, %v1342, 0.0
          %v1366 = vadd.f32 %v1364, %v1365
          %v1367 = vrot.slane %v1366, 4
          %v1368 = vadd.f32 %v1366, %v1367
          %v1369 = vrot.slane %v1368, 2
          %v1370 = vadd.f32 %v1368, %v1369
          %v1371 = vrot.slane %v1370, 1
          %v1372 = vadd.f32 %v1370, %v1371
          %v1373 = vsel %vm504, %v1343, 0.0
          %v1374 = vsel %vm504, %v1344, 0.0
          %v1375 = vadd.f32 %v1373, %v1374
          %v1376 = vrot.slane %v1375, 4
          %v1377 = vadd.f32 %v1375, %v1376
          %v1378 = vrot.slane %v1377, 2
          %v1379 = vadd.f32 %v1377, %v1378
          %v1380 = vrot.slane %v1379, 1
          %v1381 = vadd.f32 %v1379, %v1380
          %v1382 = vsel %vm504, %v1345, 0.0
          %v1383 = vsel %vm504, %v1346, 0.0
          %v1384 = vadd.f32 %v1382, %v1383
          %v1385 = vrot.slane %v1384, 4
          %v1386 = vadd.f32 %v1384, %v1385
          %v1387 = vrot.slane %v1386, 2
          %v1388 = vadd.f32 %v1386, %v1387
          %v1389 = vrot.slane %v1388, 1
          %v1390 = vadd.f32 %v1388, %v1389
          %v1391 = vsel %vm504, %v1347, 0.0
          %v1392 = vsel %vm504, %v1348, 0.0
          %v1393 = vadd.f32 %v1391, %v1392
          %v1394 = vrot.slane %v1393, 4
          %v1395 = vadd.f32 %v1393, %v1394
          %v1396 = vrot.slane %v1395, 2
          %v1397 = vadd.f32 %v1395, %v1396
          %v1398 = vrot.slane %v1397, 1
          %v1399 = vadd.f32 %v1397, %v1398
          %v1400 = vsel %vm504, %v1349, 0.0
          %v1401 = vsel %vm504, %v1350, 0.0
          %v1402 = vadd.f32 %v1400, %v1401
          %v1403 = vrot.slane %v1402, 4
          %v1404 = vadd.f32 %v1402, %v1403
          %v1405 = vrot.slane %v1404, 2
          %v1406 = vadd.f32 %v1404, %v1405
          %v1407 = vrot.slane %v1406, 1
          %v1408 = vadd.f32 %v1406, %v1407
          %v1409 = vsel %vm504, %v1351, 0.0
          %v1410 = vsel %vm504, %v1352, 0.0
          %v1411 = vadd.f32 %v1409, %v1410
          %v1412 = vrot.slane %v1411, 4
          %v1413 = vadd.f32 %v1411, %v1412
          %v1414 = vrot.slane %v1413, 2
          %v1415 = vadd.f32 %v1413, %v1414
          %v1416 = vrot.slane %v1415, 1
          %v1417 = vadd.f32 %v1415, %v1416
          %v1418 = vsel %vm504, %v1353, 0.0
          %v1419 = vsel %vm504, %v1354, 0.0
          %v1420 = vadd.f32 %v1418, %v1419
          %v1421 = vrot.slane %v1420, 4
          %v1422 = vadd.f32 %v1420, %v1421
          %v1423 = vrot.slane %v1422, 2
          %v1424 = vadd.f32 %v1422, %v1423
          %v1425 = vrot.slane %v1424, 1
          %v1426 = vadd.f32 %v1424, %v1425
          %v1427 = vxor.u32 %v594, 2147483648
          %v1428 = vmul.f32 %v1427, 1.442695
          %v1429 = vpow.pop %v1428
          %v1430 = vadd.f32 %v1429, 1.0
          %v1431 = vrcp.pop %v1430
          %v1432 = vmul.f32 1.0, %v1431
          %v1441 = vsel %vm923, %v1372, %v1363
          %v1442 = vsel %vm925, %v1381, %v1441
          %v1443 = vsel %vm927, %v1390, %v1442
          %v1444 = vsel %vm929, %v1399, %v1443
          %v1445 = vsel %vm931, %v1408, %v1444
          %v1446 = vsel %vm933, %v1417, %v1445
          %v1447 = vsel %vm935, %v1426, %v1446
          %1448 = vrot.lane.b32.xlu0 %v1447, 32
          %v1449 = vpop.permute.xlu0 %1448
          %v1451 = vmul.f32 %v1432, %v1449
          %s1452 = smul.u32 %s507, 8
          %s1453 = scalar_lea.vmem %s416, %s1452 [#allocation4]
          %v1454 = vld [vmem:[%s1453] sm:$0xff]
          %1456 = vrot.lane.b32.xlu0 %v1451, 96
          %v1457 = vpop.permute.xlu0 %1456
          %v1458 = vsel %vm504, %v1457, 0
          %1460 = vmatprep.subr.mxu0 0.0
          %1461 = vmatpush1.msra.mxu0 %v499
          %1462 = vmatprep.subr.mxu0 0.0
          %1463 = vmatpush1.msra.mxu0 %v500
          %1464 = vmatprep.subr.mxu0 0.0
          %1465 = vmatpush1.msra.mxu0 %v501
          %1466 = vmatprep.subr.mxu0 0.0
          %1467 = vmatpush1.msra.mxu0 %v502
          %1468 = vmatprep.subr.mxu0 0.0
          %1469 = vmatpush1.msra.mxu0 0.0
          %1470 = vmatprep.subr.mxu0 0.0
          %1471 = vmatpush1.msra.mxu0 0.0
          %1472 = vmatprep.subr.mxu0 0.0
          %1473 = vmatpush1.msra.mxu0 0.0
          %1474 = vmatprep.subr.mxu0 0.0
          %1475 = vmatpush1.msra.mxu0 0.0
          %1476 = vmatprep.subr.mxu0 0.0
          %1477 = vmatpush1.msra.mxu0 0.0
          %1478 = vmatprep.subr.mxu0 0.0
          %1479 = vmatpush1.msra.mxu0 0.0
          %1480 = vmatprep.subr.mxu0 0.0
          %1481 = vmatpush1.msra.mxu0 0.0
          %1482 = vmatprep.subr.mxu0 0.0
          %1483 = vmatpush1.msra.mxu0 0.0
          %1484 = vmatprep.subr.mxu0 0.0
          %1485 = vmatpush1.msra.mxu0 0.0
          %1486 = vmatprep.subr.mxu0 0.0
          %1487 = vmatpush1.msra.mxu0 0.0
          %1488 = vmatprep.subr.mxu0 0.0
          %1489 = vmatpush1.msra.mxu0 0.0
          %1490 = vmatprep.subr.mxu0 0.0
          %1491 = vmatpush1.msra.mxu0 0.0
          %1492 = vmatprep.subr.mxu0 0.0
          %1493 = vmatpush1.msra.mxu0 0.0
          %1494 = vmatprep.subr.mxu0 0.0
          %1495 = vmatpush1.msra.mxu0 0.0
          %1496 = vmatprep.subr.mxu0 0.0
          %1497 = vmatpush1.msra.mxu0 0.0
          %1498 = vmatprep.subr.mxu0 0.0
          %1499 = vmatpush1.msra.mxu0 0.0
          %1500 = vmatprep.subr.mxu0 0.0
          %1501 = vmatpush1.msra.mxu0 0.0
          %1502 = vmatprep.subr.mxu0 0.0
          %1503 = vmatpush1.msra.mxu0 0.0
          %1504 = vmatprep.subr.mxu0 0.0
          %1505 = vmatpush1.msra.mxu0 0.0
          %1506 = vmatprep.subr.mxu0 0.0
          %1507 = vmatpush1.msra.mxu0 0.0
          %1508 = vmatprep.subr.mxu0 0.0
          %1509 = vmatpush1.msra.mxu0 0.0
          %1510 = vmatprep.subr.mxu0 0.0
          %1511 = vmatpush1.msra.mxu0 0.0
          %1512 = vmatprep.subr.mxu0 0.0
          %1513 = vmatpush1.msra.mxu0 0.0
          %1514 = vmatprep.subr.mxu0 0.0
          %1515 = vmatpush1.msra.mxu0 0.0
          %1516 = vmatprep.subr.mxu0 0.0
          %1517 = vmatpush1.msra.mxu0 0.0
          %1518 = vmatprep.subr.mxu0 0.0
          %1519 = vmatpush1.msra.mxu0 0.0
          %1520 = vmatprep.subr.mxu0 0.0
          %1521 = vmatpush1.msra.mxu0 0.0
          %1522 = vmatprep.subr.mxu0 0.0
          %1523 = vmatpush1.msra.mxu0 0.0
          %1524 = vmatprep.mubr.f32.mxu0 0.0
          %1525 = vmatmul.mubr.f32.gmra.mrb[0].mxu0 %v1458
          %v1526 = vpop.f32.mrb[0].mxu0
          %v1527 = vadd.f32 0.0, %v1526
          %v1528 = vpop.f32.mrb[0].mxu0
          %1529 = vdwg.mxu0
          %v1530 = vadd.f32 %v1454, %v1527
          %1531 = vrot.lane.b32.xlu0 %v594, 64
          %v1532 = vpop.permute.xlu0 %1531
          %v1534 = vadd.f32 %v1530, %v1532
          %v1535 = vxor.u32 %v1534, 2147483648
          %v1536 = vmul.f32 %v1535, 1.442695
          %v1537 = vpow.pop %v1536
          %v1538 = vadd.f32 %v1537, 1.0
          %v1539 = vrcp.pop %v1538
          %v1540 = vmul.f32 1.0, %v1539
          %v1541 = vmul.f32 %v1540, %v596
          %1543 = vrot.lane.b32.xlu0 %v1541, 64
          %v1544 = vpop.permute.xlu0 %1543
          %v1546 = vadd.f32 %v1530, %v1544
          %v1547 = vtanh.pop %v1546
          %v1548 = vsub.f32 1.0, %v1540
          %1550 = vrot.lane.b32.xlu0 %v1547, 96
          %v1551 = vpop.permute.xlu0 %1550
          %v1553 = vmul.f32 %v1548, %v1551
          %1554 = vrot.lane.b32.xlu0 %v512, 32
          %v1555 = vpop.permute.xlu0 %1554
          %v1557 = vmul.f32 %v1540, %v1555
          %v1558 = vadd.f32 %v1553, %v1557
          %1560 = vrot.lane.b32.xlu0 %v1558, 96
          %v1561 = vpop.permute.xlu0 %1560
          %1563 = vst.msk [vmem:[#allocation2] sm:$0xff] %vm504, %v1561
          %s1564 = scalar_lea.vmem %s463, %s1452 [#allocation5]
          %1565 = vst.msk [vmem:[%s1564] sm:$0xff] %vm504, %v1561
          %v1566 = vlaneseq
          %v1567 = vshrl.u32 %v1566, 7
          %v1568 = vsub.s32 %v848, %v1567
          %v1569 = vrot.slane %v1262, %v1568
          %v1570 = vlaneseq
          %v1571 = vshrl.u32 %v1570, 7
          %v1572 = vsub.s32 %v853, %v1571
          %v1573 = vrot.slane %v1267, %v1572
          %v1574 = vsel %vm858, %v1573, %v1569
          %v1575 = vlaneseq
          %v1576 = vshrl.u32 %v1575, 7
          %v1577 = vsub.s32 %v848, %v1576
          %v1578 = vrot.slane %v1272, %v1577
          %v1579 = vlaneseq
          %v1580 = vshrl.u32 %v1579, 7
          %v1581 = vsub.s32 %v853, %v1580
          %v1582 = vrot.slane %v1277, %v1581
          %v1583 = vsel %vm858, %v1582, %v1578
          %v1584 = vlaneseq
          %v1585 = vshrl.u32 %v1584, 7
          %v1586 = vsub.s32 %v848, %v1585
          %v1587 = vrot.slane %v1282, %v1586
          %v1588 = vlaneseq
          %v1589 = vshrl.u32 %v1588, 7
          %v1590 = vsub.s32 %v853, %v1589
          %v1591 = vrot.slane %v1287, %v1590
          %v1592 = vsel %vm858, %v1591, %v1587
          %v1593 = vlaneseq
          %v1594 = vshrl.u32 %v1593, 7
          %v1595 = vsub.s32 %v848, %v1594
          %v1596 = vrot.slane %v1292, %v1595
          %v1597 = vlaneseq
          %v1598 = vshrl.u32 %v1597, 7
          %v1599 = vsub.s32 %v853, %v1598
          %v1600 = vrot.slane %v1297, %v1599
          %v1601 = vsel %vm858, %v1600, %v1596
          %v1602 = vlaneseq
          %v1603 = vshrl.u32 %v1602, 7
          %v1604 = vsub.s32 %v848, %v1603
          %v1605 = vrot.slane %v1302, %v1604
          %v1606 = vlaneseq
          %v1607 = vshrl.u32 %v1606, 7
          %v1608 = vsub.s32 %v853, %v1607
          %v1609 = vrot.slane %v1307, %v1608
          %v1610 = vsel %vm858, %v1609, %v1605
          %v1611 = vlaneseq
          %v1612 = vshrl.u32 %v1611, 7
          %v1613 = vsub.s32 %v848, %v1612
          %v1614 = vrot.slane %v1312, %v1613
          %v1615 = vlaneseq
          %v1616 = vshrl.u32 %v1615, 7
          %v1617 = vsub.s32 %v853, %v1616
          %v1618 = vrot.slane %v1317, %v1617
          %v1619 = vsel %vm858, %v1618, %v1614
          %v1620 = vlaneseq
          %v1621 = vshrl.u32 %v1620, 7
          %v1622 = vsub.s32 %v848, %v1621
          %v1623 = vrot.slane %v1322, %v1622
          %v1624 = vlaneseq
          %v1625 = vshrl.u32 %v1624, 7
          %v1626 = vsub.s32 %v853, %v1625
          %v1627 = vrot.slane %v1327, %v1626
          %v1628 = vsel %vm858, %v1627, %v1623
          %v1629 = vlaneseq
          %v1630 = vshrl.u32 %v1629, 7
          %v1631 = vsub.s32 %v848, %v1630
          %v1632 = vrot.slane %v1332, %v1631
          %v1633 = vlaneseq
          %v1634 = vshrl.u32 %v1633, 7
          %v1635 = vsub.s32 %v853, %v1634
          %v1636 = vrot.slane %v1337, %v1635
          %v1637 = vsel %vm858, %v1636, %v1632
          %v1638 = vsel %vm923, %v1583, %v1574
          %v1639 = vsel %vm925, %v1592, %v1638
          %v1640 = vsel %vm927, %v1601, %v1639
          %v1641 = vsel %vm929, %v1610, %v1640
          %v1642 = vsel %vm931, %v1619, %v1641
          %v1643 = vsel %vm933, %v1628, %v1642
          %v1644 = vsel %vm935, %v1637, %v1643
          %s1646 = scalar_lea.vmem %s469, %s1452 [#allocation6]
          %1647 = vst.msk [vmem:[%s1646] sm:$0xff] %vm938, %v1644
        $region99: #{generator_forward.1} parent=89 // loop_footer
          %s511 = sadd.s32 1, %s507
        $region100: #{generator_forward.1} parent=89 // loop_footer_branch
          %506 = sbr.rel target = $region96
        $region101: #{generator_forward.1} parent=89 // loop_exit
          _
        %s1648 = sand.u32 %s241, 1
        %s1649 = sand.u32 %s241, 1
        %s1650 = smul.addr %s1649, 56
        %s1651 = scalar_lea.vmem [#allocation5], %s1650
        %s1652 = sand.u32 %s267, 1
        %s1653 = sand.u32 %s267, 1
        %s1654 = smul.addr %s1653, 56
        %s1655 = scalar_lea.vmem [#allocation6], %s1654
        // Predicated region
        $region102: #{generator_forward.1} parent=89 // pred_check
          %p1656 = pneg %p251
        $region103: #{generator_forward.1} parent=89 // pred_check_branch
          %1658 = sbr.rel (%p1656) target = $region105
        $region104: #{generator_forward.1} parent=89 // pred_region
          %s1659 = smul.addr %s24, 8
          %s1660 = scalar_lea.vmem %s9, %s1659
          // Predicated region
          $region106: #{generator_forward.1} parent=104 // pred_check
            _
          $region107: #{generator_forward.1} parent=104 // pred_check_branch
            %1662 = sbr.rel (0) target = $region109
          $region108: #{generator_forward.1} parent=104 // pred_region
            // Predicated region
            $region110: #{generator_forward.1} parent=108 // pred_check
              _
            $region111: #{generator_forward.1} parent=108 // pred_check_branch
              %1664 = sbr.rel (0) target = $region113
            $region112: #{generator_forward.1} parent=108 // pred_region
              // Predicated region
              $region125: #{generator_forward.1} parent=112 // pred_check
                _
              $region126: #{generator_forward.1} parent=112 // pred_check_branch
                %1691 = sbr.rel (0) target = $region128
              $region127: #{generator_forward.1} parent=112 // pred_region
                loop: start=0, step=1, limit=1
                $region129: #{generator_forward.1} parent=127 // loop_pre_header
                  _
                $region130: #{generator_forward.1} parent=127 // loop_header
                  %s1693 = sphi 0, %s1697
                  %p1694 = scmp.ge.s32.totalorder %s1693, 1
                  %s1698 = sphi %s1651, %s1651
                  %s1699 = sphi %s1660, %s1660
                $region131: #{generator_forward.1} parent=127 // loop_header_branch
                  %1696 = sbr.rel (%p1694) target = $region135
                $region132: #{generator_forward.1} parent=127 // loop_body
                  %v1700 = vld [vmem:[%s1698] sm:$0xff]
                  %1701 = vst [vmem:[%s1699] sm:$0xff] %v1700
                  %v1702 = vld [vmem:[%s1698 + $0x8] sm:$0xff]
                  %1703 = vst [vmem:[%s1699 + $0x10] sm:$0xff] %v1702
                  %v1704 = vld [vmem:[%s1698 + $0x10] sm:$0xff]
                  %1705 = vst [vmem:[%s1699 + $0x20] sm:$0xff] %v1704
                  %v1706 = vld [vmem:[%s1698 + $0x18] sm:$0xff]
                  %1707 = vst [vmem:[%s1699 + $0x30] sm:$0xff] %v1706
                  %v1708 = vld [vmem:[%s1698 + $0x20] sm:$0xff]
                  %1709 = vst [vmem:[%s1699 + $0x40] sm:$0xff] %v1708
                  %v1710 = vld [vmem:[%s1698 + $0x28] sm:$0xff]
                  %1711 = vst [vmem:[%s1699 + $0x50] sm:$0xff] %v1710
                  %v1712 = vld [vmem:[%s1698 + $0x30] sm:$0xff]
                  %1713 = vst [vmem:[%s1699 + $0x60] sm:$0xff] %v1712
                $region133: #{generator_forward.1} parent=127 // loop_footer
                  %s1697 = sadd.s32 1, %s1693
                $region134: #{generator_forward.1} parent=127 // loop_footer_branch
                  %1692 = sbr.rel target = $region130
                $region135: #{generator_forward.1} parent=127 // loop_exit
                  _
              $region128: #{generator_forward.1} parent=112 // pred_fallthru
                _
              // Predicated region
              $region136: #{generator_forward.1} parent=112 // pred_check
                _
              $region137: #{generator_forward.1} parent=112 // pred_check_branch
                %1715 = sbr.rel target = $region139
              $region138: #{generator_forward.1} parent=112 // pred_region
                _
              $region139: #{generator_forward.1} parent=112 // pred_fallthru
                _
            $region113: #{generator_forward.1} parent=108 // pred_fallthru
              _
            // Predicated region
            $region114: #{generator_forward.1} parent=108 // pred_check
              _
            $region115: #{generator_forward.1} parent=108 // pred_check_branch
              %1666 = sbr.rel target = $region117
            $region116: #{generator_forward.1} parent=108 // pred_region
              loop: start=0, step=1, limit=1
              $region118: #{generator_forward.1} parent=116 // loop_pre_header
                _
              $region119: #{generator_forward.1} parent=116 // loop_header
                %s1669 = sphi 0, %s1673
                %p1670 = scmp.ge.s32.totalorder %s1669, 1
                %s1674 = sphi %s1651, %s1651
                %s1675 = sphi %s1660, %s1660
              $region120: #{generator_forward.1} parent=116 // loop_header_branch
                %1672 = sbr.rel (%p1670) target = $region124
              $region121: #{generator_forward.1} parent=116 // loop_body
                %v1676 = vld [vmem:[%s1674] sm:$0xff]
                %1677 = vst [vmem:[%s1675] sm:$0xff] %v1676
                %v1678 = vld [vmem:[%s1674 + $0x8] sm:$0xff]
                %1679 = vst [vmem:[%s1675 + $0x10] sm:$0xff] %v1678
                %v1680 = vld [vmem:[%s1674 + $0x10] sm:$0xff]
                %1681 = vst [vmem:[%s1675 + $0x20] sm:$0xff] %v1680
                %v1682 = vld [vmem:[%s1674 + $0x18] sm:$0xff]
                %1683 = vst [vmem:[%s1675 + $0x30] sm:$0xff] %v1682
                %v1684 = vld [vmem:[%s1674 + $0x20] sm:$0xff]
                %1685 = vst [vmem:[%s1675 + $0x40] sm:$0xff] %v1684
                %v1686 = vld [vmem:[%s1674 + $0x28] sm:$0xff]
                %1687 = vst [vmem:[%s1675 + $0x50] sm:$0xff] %v1686
                %v1688 = vld [vmem:[%s1674 + $0x30] sm:$0xff]
                %1689 = vst [vmem:[%s1675 + $0x60] sm:$0xff] %v1688
              $region122: #{generator_forward.1} parent=116 // loop_footer
                %s1673 = sadd.s32 1, %s1669
              $region123: #{generator_forward.1} parent=116 // loop_footer_branch
                %1668 = sbr.rel target = $region119
              $region124: #{generator_forward.1} parent=116 // loop_exit
                _
            $region117: #{generator_forward.1} parent=108 // pred_fallthru
              _
          $region109: #{generator_forward.1} parent=104 // pred_fallthru
            _
          %1716 = vnop
        $region105: #{generator_forward.1} parent=89 // pred_fallthru
          _
        // Predicated region
        $region140: #{generator_forward.1} parent=89 // pred_check
          %p1717 = pneg %p277
        $region141: #{generator_forward.1} parent=89 // pred_check_branch
          %1719 = sbr.rel (%p1717) target = $region143
        $region142: #{generator_forward.1} parent=89 // pred_region
          %s1720 = smul.addr %s24, 8
          %s1721 = scalar_lea.vmem %s10, %s1720
          // Predicated region
          $region144: #{generator_forward.1} parent=142 // pred_check
            _
          $region145: #{generator_forward.1} parent=142 // pred_check_branch
            %1723 = sbr.rel (0) target = $region147
          $region146: #{generator_forward.1} parent=142 // pred_region
            // Predicated region
            $region148: #{generator_forward.1} parent=146 // pred_check
              _
            $region149: #{generator_forward.1} parent=146 // pred_check_branch
              %1725 = sbr.rel (0) target = $region151
            $region150: #{generator_forward.1} parent=146 // pred_region
              // Predicated region
              $region163: #{generator_forward.1} parent=150 // pred_check
                _
              $region164: #{generator_forward.1} parent=150 // pred_check_branch
                %1752 = sbr.rel (0) target = $region166
              $region165: #{generator_forward.1} parent=150 // pred_region
                loop: start=0, step=1, limit=1
                $region167: #{generator_forward.1} parent=165 // loop_pre_header
                  _
                $region168: #{generator_forward.1} parent=165 // loop_header
                  %s1754 = sphi 0, %s1758
                  %p1755 = scmp.ge.s32.totalorder %s1754, 1
                  %s1759 = sphi %s1655, %s1655
                  %s1760 = sphi %s1721, %s1721
                $region169: #{generator_forward.1} parent=165 // loop_header_branch
                  %1757 = sbr.rel (%p1755) target = $region173
                $region170: #{generator_forward.1} parent=165 // loop_body
                  %v1761 = vld [vmem:[%s1759] sm:$0xff]
                  %1762 = vst [vmem:[%s1760] sm:$0xff] %v1761
                  %v1763 = vld [vmem:[%s1759 + $0x8] sm:$0xff]
                  %1764 = vst [vmem:[%s1760 + $0x10] sm:$0xff] %v1763
                  %v1765 = vld [vmem:[%s1759 + $0x10] sm:$0xff]
                  %1766 = vst [vmem:[%s1760 + $0x20] sm:$0xff] %v1765
                  %v1767 = vld [vmem:[%s1759 + $0x18] sm:$0xff]
                  %1768 = vst [vmem:[%s1760 + $0x30] sm:$0xff] %v1767
                  %v1769 = vld [vmem:[%s1759 + $0x20] sm:$0xff]
                  %1770 = vst [vmem:[%s1760 + $0x40] sm:$0xff] %v1769
                  %v1771 = vld [vmem:[%s1759 + $0x28] sm:$0xff]
                  %1772 = vst [vmem:[%s1760 + $0x50] sm:$0xff] %v1771
                  %v1773 = vld [vmem:[%s1759 + $0x30] sm:$0xff]
                  %1774 = vst [vmem:[%s1760 + $0x60] sm:$0xff] %v1773
                $region171: #{generator_forward.1} parent=165 // loop_footer
                  %s1758 = sadd.s32 1, %s1754
                $region172: #{generator_forward.1} parent=165 // loop_footer_branch
                  %1753 = sbr.rel target = $region168
                $region173: #{generator_forward.1} parent=165 // loop_exit
                  _
              $region166: #{generator_forward.1} parent=150 // pred_fallthru
                _
              // Predicated region
              $region174: #{generator_forward.1} parent=150 // pred_check
                _
              $region175: #{generator_forward.1} parent=150 // pred_check_branch
                %1776 = sbr.rel target = $region177
              $region176: #{generator_forward.1} parent=150 // pred_region
                _
              $region177: #{generator_forward.1} parent=150 // pred_fallthru
                _
            $region151: #{generator_forward.1} parent=146 // pred_fallthru
              _
            // Predicated region
            $region152: #{generator_forward.1} parent=146 // pred_check
              _
            $region153: #{generator_forward.1} parent=146 // pred_check_branch
              %1727 = sbr.rel target = $region155
            $region154: #{generator_forward.1} parent=146 // pred_region
              loop: start=0, step=1, limit=1
              $region156: #{generator_forward.1} parent=154 // loop_pre_header
                _
              $region157: #{generator_forward.1} parent=154 // loop_header
                %s1730 = sphi 0, %s1734
                %p1731 = scmp.ge.s32.totalorder %s1730, 1
                %s1735 = sphi %s1655, %s1655
                %s1736 = sphi %s1721, %s1721
              $region158: #{generator_forward.1} parent=154 // loop_header_branch
                %1733 = sbr.rel (%p1731) target = $region162
              $region159: #{generator_forward.1} parent=154 // loop_body
                %v1737 = vld [vmem:[%s1735] sm:$0xff]
                %1738 = vst [vmem:[%s1736] sm:$0xff] %v1737
                %v1739 = vld [vmem:[%s1735 + $0x8] sm:$0xff]
                %1740 = vst [vmem:[%s1736 + $0x10] sm:$0xff] %v1739
                %v1741 = vld [vmem:[%s1735 + $0x10] sm:$0xff]
                %1742 = vst [vmem:[%s1736 + $0x20] sm:$0xff] %v1741
                %v1743 = vld [vmem:[%s1735 + $0x18] sm:$0xff]
                %1744 = vst [vmem:[%s1736 + $0x30] sm:$0xff] %v1743
                %v1745 = vld [vmem:[%s1735 + $0x20] sm:$0xff]
                %1746 = vst [vmem:[%s1736 + $0x40] sm:$0xff] %v1745
                %v1747 = vld [vmem:[%s1735 + $0x28] sm:$0xff]
                %1748 = vst [vmem:[%s1736 + $0x50] sm:$0xff] %v1747
                %v1749 = vld [vmem:[%s1735 + $0x30] sm:$0xff]
                %1750 = vst [vmem:[%s1736 + $0x60] sm:$0xff] %v1749
              $region160: #{generator_forward.1} parent=154 // loop_footer
                %s1734 = sadd.s32 1, %s1730
              $region161: #{generator_forward.1} parent=154 // loop_footer_branch
                %1729 = sbr.rel target = $region157
              $region162: #{generator_forward.1} parent=154 // loop_exit
                _
            $region155: #{generator_forward.1} parent=146 // pred_fallthru
              _
          $region147: #{generator_forward.1} parent=142 // pred_fallthru
            _
          %1777 = vnop
        $region143: #{generator_forward.1} parent=89 // pred_fallthru
          _
      $region90: #{generator_forward.1} parent=5 // pred_fallthru
        _
      %p1778 = scmp.le.s32.totalorder 2, %s19
      // Predicated region
      $region178: #{generator_forward.1} parent=5 // pred_check
        %p1779 = pneg %p1778
      $region179: #{generator_forward.1} parent=5 // pred_check_branch
        %1781 = sbr.rel (%p1779) target = $region181
      $region180: #{generator_forward.1} parent=5 // pred_region
        %s1782 = ssub.s32 %s19, 2
        // Predicated region
        $region182: #{generator_forward.1} parent=180 // pred_check
          %p1783 = pneg %p257
        $region183: #{generator_forward.1} parent=180 // pred_check_branch
          %1785 = sbr.rel (%p1783) target = $region185
        $region184: #{generator_forward.1} parent=180 // pred_region
          %s1786 = sand.u32 %s242, 1
          %s1787 = sand.u32 %s242, 1
          %s1788 = smul.addr %s1787, 56
          %s1789 = scalar_lea.vmem [#allocation5], %s1788
        $region185: #{generator_forward.1} parent=180 // pred_fallthru
          _
        // Predicated region
        $region186: #{generator_forward.1} parent=180 // pred_check
          %p1790 = pneg %p283
        $region187: #{generator_forward.1} parent=180 // pred_check_branch
          %1792 = sbr.rel (%p1790) target = $region189
        $region188: #{generator_forward.1} parent=180 // pred_region
          %s1793 = sand.u32 %s268, 1
          %s1794 = sand.u32 %s268, 1
          %s1795 = smul.addr %s1794, 56
          %s1796 = scalar_lea.vmem [#allocation6], %s1795
        $region189: #{generator_forward.1} parent=180 // pred_fallthru
          _
      $region181: #{generator_forward.1} parent=5 // pred_fallthru
        _
    $region6: #{generator_forward.1} parent=1 // loop_footer
      %s23 = sadd.s32 1, %s19
    $region7: #{generator_forward.1} parent=1 // loop_footer_branch
      %18 = sbr.rel target = $region3
    $region8: #{generator_forward.1} parent=1 // loop_exit
      _

</llo_original>
